<compile_context>
chip_gen: v5e
topology: v5e:2x2
jax: 0.10.0
libtpu: 0.0.40
codegen_flags: <defaults>
</compile_context>

<pallas_src>
import jax
import jax.numpy as jnp
from jax.experimental import pallas as pl
from jax.experimental.pallas import tpu as pltpu


def _round_up(x, m):
    return ((x + m - 1) // m) * m


def _fused_pooler_head_kernel(mean_ref, pool_w_ref, pool_b_ref,
                              w_head_ref, b_head_ref, out_ref):
    """pooled = tanh(mean @ W_pool + b_pool); out = sigmoid(pooled @ W_head + b_head)."""
    # Pooler: bf16 MXU matmul, f32 accumulation, f32 bias + tanh (EUP).
    pooled = jnp.tanh(
        jnp.dot(mean_ref[...], pool_w_ref[...],
                preferred_element_type=jnp.float32)
        + pool_b_ref[...]                                   # (TB, 768) f32
    )
    # Collapsed head (3 Linears + identity dropouts == one affine map).
    # N=1 output -> VPU multiply + XLU row-reduce instead of a padded MXU matmul.
    logits = jnp.sum(pooled * w_head_ref[...], axis=-1, keepdims=True) \
        + b_head_ref[...]                                   # (TB, 1) f32
    out_ref[...] = jax.nn.sigmoid(logits).astype(out_ref.dtype)


def fused_pooler_head(mean, pool_w, pool_b, w_head_row, b_head):
    """mean: (B, 768) f32. Returns sigmoid probabilities, shape (B, 1) f32."""
    B, H = mean.shape
    TB = min(_round_up(max(B, 1), 8), 512)      # batch tile, multiple of 8
    padded_B = _round_up(B, TB)
    if padded_B != B:
        mean = jnp.pad(mean, ((0, padded_B - B), (0, 0)))
    grid = (padded_B // TB,)

    out = pl.pallas_call(
        _fused_pooler_head_kernel,
        out_shape=jax.ShapeDtypeStruct((padded_B, 1), jnp.float32),
        grid_spec=pltpu.PrefetchScalarGridSpec(
            num_scalar_prefetch=0,
            grid=grid,
            in_specs=[
                pl.BlockSpec((TB, H), lambda i: (i, 0)),    # mean tile (pipelined)
                pl.BlockSpec((H, H), lambda i: (0, 0)),     # pool_w (resident)
                pl.BlockSpec((1, H), lambda i: (0, 0)),     # pool_b (resident)
                pl.BlockSpec((1, H), lambda i: (0, 0)),     # fused head weight row
                pl.BlockSpec((1, 1), lambda i: (0, 0)),     # fused head bias
            ],
            out_specs=pl.BlockSpec((TB, 1), lambda i: (i, 0)),
        ),
        compiler_params=pltpu.CompilerParams(
            dimension_semantics=("parallel",)),
    )(
        mean.astype(jnp.bfloat16),
        pool_w.astype(jnp.bfloat16),
        pool_b.reshape(1, H).astype(jnp.float32),
        w_head_row.astype(jnp.float32),
        b_head.astype(jnp.float32),
    )
    return out[:B]


def fold_head_params(params):
    """Collapse Linear(768,256)->Linear(256,128)->Linear(128,1) into one affine map."""
    w1, b1 = params["w1"], params["b1"]
    w2, b2 = params["w2"], params["b2"]
    w3, b3 = params["w3"], params["b3"]
    w_head = w1 @ w2 @ w3                 # (768, 1)
    b_head = (b1 @ w2 + b2) @ w3 + b3     # (1, 1)
    return w_head.T, b_head               # (1, 768), (1, 1)


def init_params(key):
    """Deterministic PyTorch-nn.Linear-style init (U(-1/sqrt(fan_in), 1/sqrt(fan_in)))."""
    def linear(k, fan_in, fan_out):
        kw, kb = jax.random.split(k)
        bound = 1.0 / jnp.sqrt(float(fan_in))
        w = jax.random.uniform(kw, (fan_in, fan_out), jnp.float32, -bound, bound)
        b = jax.random.uniform(kb, (1, fan_out), jnp.float32, -bound, bound)
        return w, b

    k1, k2, k3 = jax.random.split(key, 3)
    w1, b1 = linear(k1, 768, 256)
    w2, b2 = linear(k2, 256, 128)
    w3, b3 = linear(k3, 128, 1)
    return {"w1": w1, "b1": b1, "w2": w2, "b2": b2, "w3": w3, "b3": b3}


@jax.jit
def transformer_forward(input_ids, attention_masks, token_type_ids, params, backbone):
    """Mirror of Transformer.forward. Backbone is a deterministic stand-in (plain JAX glue)."""
    # TODO(synk): real facebook/bart-base forward pass not implemented; stand-in pooler below
    # (embedding lookup + masked mean stay in XLA; pooler matmul+tanh is fused in the kernel).
    del token_type_ids  # kept for interface parity; unused by the stand-in
    emb = backbone["embedding"][input_ids]                       # (B, S, 768)
    mask = attention_masks[..., None].astype(jnp.float32)        # (B, S, 1)
    mean = (emb * mask).sum(axis=1) / jnp.maximum(mask.sum(axis=1), 1.0)  # (B, 768)
    w_head_row, b_head = fold_head_params(params)                # tiny, one-time fold
    return fused_pooler_head(mean, backbone["pool_w"], backbone["pool_b"],
                             w_head_row, b_head)


if __name__ == "__main__":
    key = jax.random.PRNGKey(0)
    k_params, k_emb, k_pool, k_ids = jax.random.split(key, 4)

    params = init_params(k_params)

    # Small, deterministic synthetic backbone + inputs.
    B, S, V, H = 8, 8, 64, 768
    backbone = {
        "embedding": jax.random.normal(k_emb, (V, H), jnp.float32) * 0.02,
        "pool_w": jax.random.normal(k_pool, (H, H), jnp.float32) * 0.02,
        "pool_b": jnp.zeros((H,), jnp.float32),
    }
    input_ids = jax.random.randint(k_ids, (B, S), 0, V)
    attention_masks = jnp.ones((B, S), jnp.int32)
    token_type_ids = jnp.zeros((B, S), jnp.int32)

    out = transformer_forward(input_ids, attention_masks, token_type_ids, params, backbone)
    out = jax.block_until_ready(out)

    assert out.shape == (B, 1), out.shape
    assert bool(jnp.all(jnp.isfinite(out)))
    assert bool(jnp.all((out >= 0.0) & (out <= 1.0)))

    # --- Reference A: same math as the kernel (bf16 pooler matmul, folded head). ---
    emb = backbone["embedding"][input_ids]
    mask = attention_masks[..., None].astype(jnp.float32)
    mean = (emb * mask).sum(axis=1) / jnp.maximum(mask.sum(axis=1), 1.0)
    w_head_row, b_head = fold_head_params(params)
    pooled_bf = jnp.tanh(
        jnp.dot(mean.astype(jnp.bfloat16), backbone["pool_w"].astype(jnp.bfloat16),
                preferred_element_type=jnp.float32)
        + backbone["pool_b"])
    ref_a = jax.nn.sigmoid(
        jnp.sum(pooled_bf * w_head_row, axis=-1, keepdims=True) + b_head)
    assert jnp.allclose(out, ref_a, atol=5e-4, rtol=5e-4), \
        float(jnp.max(jnp.abs(out - ref_a)))

    # --- Reference B: original module structure, full f32 (semantic fidelity). ---
    pooled_f32 = jnp.tanh(mean @ backbone["pool_w"] + backbone["pool_b"])
    h1 = pooled_f32 @ params["w1"] + params["b1"]          # dense_layer_1 (+dropout=id)
    h2 = h1 @ params["w2"] + params["b2"]                  # dense_layer_2 (+dropout=id)
    ref_b = jax.nn.sigmoid(h2 @ params["w3"] + params["b3"])  # cls_layer + sigmoid
    assert jnp.allclose(out, ref_b, atol=5e-3), \
        float(jnp.max(jnp.abs(out - ref_b)))

    print("KERNEL_OK")
</pallas_src>

<mosaic_0001>
module attributes {stable_mosaic.version = 11 : i64} {
  func.func @_fused_pooler_head_kernel(%arg0: i32, %arg1: memref<8x768xbf16, #tpu.memory_space<vmem>>, %arg2: memref<768x768xbf16, #tpu.memory_space<vmem>>, %arg3: memref<1x768xf32, #tpu.memory_space<vmem>>, %arg4: memref<1x768xf32, #tpu.memory_space<vmem>>, %arg5: memref<1x1xf32, #tpu.memory_space<vmem>>, %arg6: memref<8x1xf32, #tpu.memory_space<vmem>>) attributes {dimension_semantics = [#tpu.dimension_semantics<parallel>], iteration_bounds = array<i64: 1>, scalar_prefetch = 0 : i64, scratch_operands = 0 : i64, tpu.core_type = #tpu.core_type<tc>, window_params = [{transform_indices = @transform_0, window_bounds = array<i64: 8, 768>}, {pipeline_mode = #tpu.pipeline_mode<synchronous>, transform_indices = @transform_1, window_bounds = array<i64: 768, 768>}, {pipeline_mode = #tpu.pipeline_mode<synchronous>, transform_indices = @transform_2, window_bounds = array<i64: 1, 768>}, {pipeline_mode = #tpu.pipeline_mode<synchronous>, transform_indices = @transform_3, window_bounds = array<i64: 1, 768>}, {pipeline_mode = #tpu.pipeline_mode<synchronous>, transform_indices = @transform_4, window_bounds = array<i64: 1, 1>}, {transform_indices = @transform_5, window_bounds = array<i64: 8, 1>}]} {
    %c0 = arith.constant 0 : index
    %c0_0 = arith.constant 0 : index
    %0 = vector.load %arg1[%c0, %c0_0] : memref<8x768xbf16, #tpu.memory_space<vmem>>, vector<8x768xbf16>
    %c0_1 = arith.constant 0 : index
    %c0_2 = arith.constant 0 : index
    %1 = vector.load %arg2[%c0_1, %c0_2] : memref<768x768xbf16, #tpu.memory_space<vmem>>, vector<768x768xbf16>
    %cst = arith.constant dense<0.000000e+00> : vector<8x768xf32>
    %2 = tpu.matmul %0, %1, %cst {dimension_numbers = #tpu.dot_dimension_numbers<[1], [0], [0], [1], [0, 0, 1, 1], [], []>} : vector<8x768xbf16>, vector<768x768xbf16>, vector<8x768xf32> -> vector<8x768xf32>
    %c0_3 = arith.constant 0 : index
    %c0_4 = arith.constant 0 : index
    %3 = vector.load %arg3[%c0_3, %c0_4] : memref<1x768xf32, #tpu.memory_space<vmem>>, vector<1x768xf32>
    %4 = vector.broadcast %3 : vector<1x768xf32> to vector<8x768xf32>
    %5 = arith.addf %2, %4 : vector<8x768xf32>
    %6 = math.tanh %5 : vector<8x768xf32>
    %c0_5 = arith.constant 0 : index
    %c0_6 = arith.constant 0 : index
    %7 = vector.load %arg4[%c0_5, %c0_6] : memref<1x768xf32, #tpu.memory_space<vmem>>, vector<1x768xf32>
    %8 = vector.broadcast %7 : vector<1x768xf32> to vector<8x768xf32>
    %9 = arith.mulf %6, %8 : vector<8x768xf32>
    %cst_7 = arith.constant dense<0.000000e+00> : vector<8xf32>
    %10 = vector.multi_reduction <add>, %9, %cst_7 [1] : vector<8x768xf32> to vector<8xf32>
    %11 = vector.shape_cast %10 : vector<8xf32> to vector<8x1xf32>
    %c0_8 = arith.constant 0 : index
    %c0_9 = arith.constant 0 : index
    %12 = vector.load %arg5[%c0_8, %c0_9] : memref<1x1xf32, #tpu.memory_space<vmem>>, vector<1x1xf32>
    %13 = vector.broadcast %12 : vector<1x1xf32> to vector<8x1xf32>
    %14 = arith.addf %11, %13 : vector<8x1xf32>
    %15 = arith.negf %14 : vector<8x1xf32>
    %16 = math.exp %15 : vector<8x1xf32>
    %cst_10 = arith.constant 1.000000e+00 : f32
    %17 = vector.broadcast %cst_10 : f32 to vector<8x1xf32>
    %18 = arith.addf %17, %16 : vector<8x1xf32>
    %19 = arith.divf %17, %18 : vector<8x1xf32>
    %c0_11 = arith.constant 0 : index
    %c0_12 = arith.constant 0 : index
    %20 = vector.load %arg6[%c0_11, %c0_12] : memref<8x1xf32, #tpu.memory_space<vmem>>, vector<8x1xf32>
    tpu.vector_store %arg6[%c0_11, %c0_12], %19 {strides = array<i32>} : memref<8x1xf32, #tpu.memory_space<vmem>>, vector<8x1xf32>,
    return
  }
  func.func @transform_0(%arg0: i32) -> (i32, i32) {
    %c0_i32 = arith.constant 0 : i32
    %c0_i32_0 = arith.constant 0 : i32
    return %arg0, %c0_i32 : i32, i32
  }
  func.func @transform_1(%arg0: i32) -> (i32, i32) {
    %c0_i32 = arith.constant 0 : i32
    %c0_i32_0 = arith.constant 0 : i32
    %c0_i32_1 = arith.constant 0 : i32
    return %c0_i32, %c0_i32_0 : i32, i32
  }
  func.func @transform_2(%arg0: i32) -> (i32, i32) {
    %c0_i32 = arith.constant 0 : i32
    %c0_i32_0 = arith.constant 0 : i32
    %c0_i32_1 = arith.constant 0 : i32
    return %c0_i32, %c0_i32_0 : i32, i32
  }
  func.func @transform_3(%arg0: i32) -> (i32, i32) {
    %c0_i32 = arith.constant 0 : i32
    %c0_i32_0 = arith.constant 0 : i32
    %c0_i32_1 = arith.constant 0 : i32
    return %c0_i32, %c0_i32_0 : i32, i32
  }
  func.func @transform_4(%arg0: i32) -> (i32, i32) {
    %c0_i32 = arith.constant 0 : i32
    %c0_i32_0 = arith.constant 0 : i32
    %c0_i32_1 = arith.constant 0 : i32
    return %c0_i32, %c0_i32_0 : i32, i32
  }
  func.func @transform_5(%arg0: i32) -> (i32, i32) {
    %c0_i32 = arith.constant 0 : i32
    %c0_i32_0 = arith.constant 0 : i32
    return %arg0, %c0_i32 : i32, i32
  }
}

</mosaic_0001>

<llo_original>
// kernel: transformer_forward.1
$region0: #{transformer_forward.1}
  #allocation0 [shape = 'u32[]', space=smem, size = 0x4, offset = 0x4, fixed_abs, tag = 'smem constant byte address 0x4 - core index']
  #allocation1 [shape = 'u32[72,128]{1,0:T(1,128)}', space=vmem, size = 0x9000, scoped, tag = 'internal scratch']
  #allocation2 [shape = 'f32[1,1]{1,0:T(1,128)S(1)}', space=vmem, size = 0x200, scoped, tag = 'scoped memory for transformer_forward.1']
  %s0 = inlined_call_operand.vmem [shape: bf16[8,768], index: 0, kind: input, shape index: {}]
  %s1 = inlined_call_operand.vmem [shape: bf16[768,768], index: 1, kind: input, shape index: {}]
  %s2 = inlined_call_operand.vmem [shape: f32[1,768], index: 2, kind: input, shape index: {}]
  %s3 = inlined_call_operand.vmem [shape: f32[1,768], index: 3, kind: input, shape index: {}]
  %s4 = inlined_call_operand.<no memory space> [shape: f32[1,1], index: 4, kind: input, shape index: {}]
  %s5 = inlined_call_operand.vmem [shape: f32[8,1], index: 5, kind: output, shape index: {}]
  %s6 = sld [smem:[#allocation0]]
  $region30: #{transformer_forward.1} parent=0
    _
  %s8 = ssub.s32 1, %s6
  %s9 = scalar_select 0, %s8, %s6
  %v10 = vstv %s4
  %11 = vst [vmem:[#allocation2] sm:$0x1] %v10
  // Predicated region
  $region2: #{transformer_forward.1} parent=0 // pred_check
    _
  $region3: #{transformer_forward.1} parent=0 // pred_check_branch
    %13 = sbr.rel (0) target = $region5
  $region4: #{transformer_forward.1} parent=0 // pred_region
    _
  $region5: #{transformer_forward.1} parent=0 // pred_fallthru
    _
  // Predicated region
  $region6: #{transformer_forward.1} parent=0 // pred_check
    _
  $region7: #{transformer_forward.1} parent=0 // pred_check_branch
    %15 = sbr.rel (0) target = $region9
  $region8: #{transformer_forward.1} parent=0 // pred_region
    _
  $region9: #{transformer_forward.1} parent=0 // pred_fallthru
    _
  // Predicated region
  $region10: #{transformer_forward.1} parent=0 // pred_check
    _
  $region11: #{transformer_forward.1} parent=0 // pred_check_branch
    %17 = sbr.rel (0) target = $region13
  $region12: #{transformer_forward.1} parent=0 // pred_region
    _
  $region13: #{transformer_forward.1} parent=0 // pred_fallthru
    _
  // Predicated region
  $region14: #{transformer_forward.1} parent=0 // pred_check
    _
  $region15: #{transformer_forward.1} parent=0 // pred_check_branch
    %19 = sbr.rel (0) target = $region17
  $region16: #{transformer_forward.1} parent=0 // pred_region
    _
  $region17: #{transformer_forward.1} parent=0 // pred_fallthru
    _
  // Predicated region
  $region18: #{transformer_forward.1} parent=0 // pred_check
    _
  $region19: #{transformer_forward.1} parent=0 // pred_check_branch
    %21 = sbr.rel (0) target = $region21
  $region20: #{transformer_forward.1} parent=0 // pred_region
    _
  $region21: #{transformer_forward.1} parent=0 // pred_fallthru
    _
  %v22 = vld [vmem:[%s0] sm:$0xff]
  %v23 = vld [vmem:[%s0 + $0x8] sm:$0xff]
  %v24 = vld [vmem:[%s0 + $0x10] sm:$0xff]
  %v25 = vld [vmem:[%s1] sm:$0xff]
  %v26 = vld [vmem:[%s1 + $0x8] sm:$0xff]
  %v27 = vld [vmem:[%s1 + $0x10] sm:$0xff]
  %v28 = vld [vmem:[%s1 + $0x18] sm:$0xff]
  %v29 = vld [vmem:[%s1 + $0x20] sm:$0xff]
  %v30 = vld [vmem:[%s1 + $0x28] sm:$0xff]
  %v31 = vld [vmem:[%s1 + $0x30] sm:$0xff]
  %v32 = vld [vmem:[%s1 + $0x38] sm:$0xff]
  %v33 = vld [vmem:[%s1 + $0x40] sm:$0xff]
  %v34 = vld [vmem:[%s1 + $0x48] sm:$0xff]
  %v35 = vld [vmem:[%s1 + $0x50] sm:$0xff]
  %v36 = vld [vmem:[%s1 + $0x58] sm:$0xff]
  %v37 = vld [vmem:[%s1 + $0x60] sm:$0xff]
  %v38 = vld [vmem:[%s1 + $0x68] sm:$0xff]
  %v39 = vld [vmem:[%s1 + $0x70] sm:$0xff]
  %v40 = vld [vmem:[%s1 + $0x78] sm:$0xff]
  %v41 = vld [vmem:[%s1 + $0x80] sm:$0xff]
  %v42 = vld [vmem:[%s1 + $0x88] sm:$0xff]
  %v43 = vld [vmem:[%s1 + $0x90] sm:$0xff]
  %v44 = vld [vmem:[%s1 + $0x98] sm:$0xff]
  %v45 = vld [vmem:[%s1 + $0xa0] sm:$0xff]
  %v46 = vld [vmem:[%s1 + $0xa8] sm:$0xff]
  %v47 = vld [vmem:[%s1 + $0xb0] sm:$0xff]
  %v48 = vld [vmem:[%s1 + $0xb8] sm:$0xff]
  %v49 = vld [vmem:[%s1 + $0xc0] sm:$0xff]
  %v50 = vld [vmem:[%s1 + $0xc8] sm:$0xff]
  %v51 = vld [vmem:[%s1 + $0xd0] sm:$0xff]
  %v52 = vld [vmem:[%s1 + $0xd8] sm:$0xff]
  %v53 = vld [vmem:[%s1 + $0xe0] sm:$0xff]
  %v54 = vld [vmem:[%s1 + $0xe8] sm:$0xff]
  %v55 = vld [vmem:[%s1 + $0xf0] sm:$0xff]
  %v56 = vld [vmem:[%s1 + $0xf8] sm:$0xff]
  %v57 = vld [vmem:[%s1 + $0x100] sm:$0xff]
  %v58 = vld [vmem:[%s1 + $0x108] sm:$0xff]
  %v59 = vld [vmem:[%s1 + $0x110] sm:$0xff]
  %v60 = vld [vmem:[%s1 + $0x118] sm:$0xff]
  %v61 = vld [vmem:[%s1 + $0x120] sm:$0xff]
  %v62 = vld [vmem:[%s1 + $0x128] sm:$0xff]
  %v63 = vld [vmem:[%s1 + $0x130] sm:$0xff]
  %v64 = vld [vmem:[%s1 + $0x138] sm:$0xff]
  %v65 = vld [vmem:[%s1 + $0x140] sm:$0xff]
  %v66 = vld [vmem:[%s1 + $0x148] sm:$0xff]
  %v67 = vld [vmem:[%s1 + $0x150] sm:$0xff]
  %v68 = vld [vmem:[%s1 + $0x158] sm:$0xff]
  %v69 = vld [vmem:[%s1 + $0x160] sm:$0xff]
  %v70 = vld [vmem:[%s1 + $0x168] sm:$0xff]
  %v71 = vld [vmem:[%s1 + $0x170] sm:$0xff]
  %v72 = vld [vmem:[%s1 + $0x178] sm:$0xff]
  %v73 = vld [vmem:[%s1 + $0x180] sm:$0xff]
  %v74 = vld [vmem:[%s1 + $0x188] sm:$0xff]
  %v75 = vld [vmem:[%s1 + $0x190] sm:$0xff]
  %v76 = vld [vmem:[%s1 + $0x198] sm:$0xff]
  %v77 = vld [vmem:[%s1 + $0x1a0] sm:$0xff]
  %v78 = vld [vmem:[%s1 + $0x1a8] sm:$0xff]
  %v79 = vld [vmem:[%s1 + $0x1b0] sm:$0xff]
  %v80 = vld [vmem:[%s1 + $0x1b8] sm:$0xff]
  %v81 = vld [vmem:[%s1 + $0x1c0] sm:$0xff]
  %v82 = vld [vmem:[%s1 + $0x1c8] sm:$0xff]
  %v83 = vld [vmem:[%s1 + $0x1d0] sm:$0xff]
  %v84 = vld [vmem:[%s1 + $0x1d8] sm:$0xff]
  %v85 = vld [vmem:[%s1 + $0x1e0] sm:$0xff]
  %v86 = vld [vmem:[%s1 + $0x1e8] sm:$0xff]
  %v87 = vld [vmem:[%s1 + $0x1f0] sm:$0xff]
  %v88 = vld [vmem:[%s1 + $0x1f8] sm:$0xff]
  %v89 = vld [vmem:[%s1 + $0x200] sm:$0xff]
  %v90 = vld [vmem:[%s1 + $0x208] sm:$0xff]
  %v91 = vld [vmem:[%s1 + $0x210] sm:$0xff]
  %v92 = vld [vmem:[%s1 + $0x218] sm:$0xff]
  %v93 = vld [vmem:[%s1 + $0x220] sm:$0xff]
  %v94 = vld [vmem:[%s1 + $0x228] sm:$0xff]
  %v95 = vld [vmem:[%s1 + $0x230] sm:$0xff]
  %v96 = vld [vmem:[%s1 + $0x238] sm:$0xff]
  %v97 = vld [vmem:[%s1 + $0x240] sm:$0xff]
  %v98 = vld [vmem:[%s1 + $0x248] sm:$0xff]
  %v99 = vld [vmem:[%s1 + $0x250] sm:$0xff]
  %v100 = vld [vmem:[%s1 + $0x258] sm:$0xff]
  %v101 = vld [vmem:[%s1 + $0x260] sm:$0xff]
  %v102 = vld [vmem:[%s1 + $0x268] sm:$0xff]
  %v103 = vld [vmem:[%s1 + $0x270] sm:$0xff]
  %v104 = vld [vmem:[%s1 + $0x278] sm:$0xff]
  %v105 = vld [vmem:[%s1 + $0x280] sm:$0xff]
  %v106 = vld [vmem:[%s1 + $0x288] sm:$0xff]
  %v107 = vld [vmem:[%s1 + $0x290] sm:$0xff]
  %v108 = vld [vmem:[%s1 + $0x298] sm:$0xff]
  %v109 = vld [vmem:[%s1 + $0x2a0] sm:$0xff]
  %v110 = vld [vmem:[%s1 + $0x2a8] sm:$0xff]
  %v111 = vld [vmem:[%s1 + $0x2b0] sm:$0xff]
  %v112 = vld [vmem:[%s1 + $0x2b8] sm:$0xff]
  %v113 = vld [vmem:[%s1 + $0x2c0] sm:$0xff]
  %v114 = vld [vmem:[%s1 + $0x2c8] sm:$0xff]
  %v115 = vld [vmem:[%s1 + $0x2d0] sm:$0xff]
  %v116 = vld [vmem:[%s1 + $0x2d8] sm:$0xff]
  %v117 = vld [vmem:[%s1 + $0x2e0] sm:$0xff]
  %v118 = vld [vmem:[%s1 + $0x2e8] sm:$0xff]
  %v119 = vld [vmem:[%s1 + $0x2f0] sm:$0xff]
  %v120 = vld [vmem:[%s1 + $0x2f8] sm:$0xff]
  %v121 = vld [vmem:[%s1 + $0x300] sm:$0xff]
  %v122 = vld [vmem:[%s1 + $0x308] sm:$0xff]
  %v123 = vld [vmem:[%s1 + $0x310] sm:$0xff]
  %v124 = vld [vmem:[%s1 + $0x318] sm:$0xff]
  %v125 = vld [vmem:[%s1 + $0x320] sm:$0xff]
  %v126 = vld [vmem:[%s1 + $0x328] sm:$0xff]
  %v127 = vld [vmem:[%s1 + $0x330] sm:$0xff]
  %v128 = vld [vmem:[%s1 + $0x338] sm:$0xff]
  %v129 = vld [vmem:[%s1 + $0x340] sm:$0xff]
  %v130 = vld [vmem:[%s1 + $0x348] sm:$0xff]
  %v131 = vld [vmem:[%s1 + $0x350] sm:$0xff]
  %v132 = vld [vmem:[%s1 + $0x358] sm:$0xff]
  %v133 = vld [vmem:[%s1 + $0x360] sm:$0xff]
  %v134 = vld [vmem:[%s1 + $0x368] sm:$0xff]
  %v135 = vld [vmem:[%s1 + $0x370] sm:$0xff]
  %v136 = vld [vmem:[%s1 + $0x378] sm:$0xff]
  %v137 = vld [vmem:[%s1 + $0x380] sm:$0xff]
  %v138 = vld [vmem:[%s1 + $0x388] sm:$0xff]
  %v139 = vld [vmem:[%s1 + $0x390] sm:$0xff]
  %v140 = vld [vmem:[%s1 + $0x398] sm:$0xff]
  %v141 = vld [vmem:[%s1 + $0x3a0] sm:$0xff]
  %v142 = vld [vmem:[%s1 + $0x3a8] sm:$0xff]
  %v143 = vld [vmem:[%s1 + $0x3b0] sm:$0xff]
  %v144 = vld [vmem:[%s1 + $0x3b8] sm:$0xff]
  %v145 = vld [vmem:[%s1 + $0x3c0] sm:$0xff]
  %v146 = vld [vmem:[%s1 + $0x3c8] sm:$0xff]
  %v147 = vld [vmem:[%s1 + $0x3d0] sm:$0xff]
  %v148 = vld [vmem:[%s1 + $0x3d8] sm:$0xff]
  %v149 = vld [vmem:[%s1 + $0x3e0] sm:$0xff]
  %v150 = vld [vmem:[%s1 + $0x3e8] sm:$0xff]
  %v151 = vld [vmem:[%s1 + $0x3f0] sm:$0xff]
  %v152 = vld [vmem:[%s1 + $0x3f8] sm:$0xff]
  %v153 = vld [vmem:[%s1 + $0x400] sm:$0xff]
  %v154 = vld [vmem:[%s1 + $0x408] sm:$0xff]
  %v155 = vld [vmem:[%s1 + $0x410] sm:$0xff]
  %v156 = vld [vmem:[%s1 + $0x418] sm:$0xff]
  %v157 = vld [vmem:[%s1 + $0x420] sm:$0xff]
  %v158 = vld [vmem:[%s1 + $0x428] sm:$0xff]
  %v159 = vld [vmem:[%s1 + $0x430] sm:$0xff]
  %v160 = vld [vmem:[%s1 + $0x438] sm:$0xff]
  %v161 = vld [vmem:[%s1 + $0x440] sm:$0xff]
  %v162 = vld [vmem:[%s1 + $0x448] sm:$0xff]
  %v163 = vld [vmem:[%s1 + $0x450] sm:$0xff]
  %v164 = vld [vmem:[%s1 + $0x458] sm:$0xff]
  %v165 = vld [vmem:[%s1 + $0x460] sm:$0xff]
  %v166 = vld [vmem:[%s1 + $0x468] sm:$0xff]
  %v167 = vld [vmem:[%s1 + $0x470] sm:$0xff]
  %v168 = vld [vmem:[%s1 + $0x478] sm:$0xff]
  %v169 = vld [vmem:[%s1 + $0x480] sm:$0xff]
  %v170 = vld [vmem:[%s1 + $0x488] sm:$0xff]
  %v171 = vld [vmem:[%s1 + $0x490] sm:$0xff]
  %v172 = vld [vmem:[%s1 + $0x498] sm:$0xff]
  %v173 = vld [vmem:[%s1 + $0x4a0] sm:$0xff]
  %v174 = vld [vmem:[%s1 + $0x4a8] sm:$0xff]
  %v175 = vld [vmem:[%s1 + $0x4b0] sm:$0xff]
  %v176 = vld [vmem:[%s1 + $0x4b8] sm:$0xff]
  %v177 = vld [vmem:[%s1 + $0x4c0] sm:$0xff]
  %v178 = vld [vmem:[%s1 + $0x4c8] sm:$0xff]
  %v179 = vld [vmem:[%s1 + $0x4d0] sm:$0xff]
  %v180 = vld [vmem:[%s1 + $0x4d8] sm:$0xff]
  %v181 = vld [vmem:[%s1 + $0x4e0] sm:$0xff]
  %v182 = vld [vmem:[%s1 + $0x4e8] sm:$0xff]
  %v183 = vld [vmem:[%s1 + $0x4f0] sm:$0xff]
  %v184 = vld [vmem:[%s1 + $0x4f8] sm:$0xff]
  %v185 = vld [vmem:[%s1 + $0x500] sm:$0xff]
  %v186 = vld [vmem:[%s1 + $0x508] sm:$0xff]
  %v187 = vld [vmem:[%s1 + $0x510] sm:$0xff]
  %v188 = vld [vmem:[%s1 + $0x518] sm:$0xff]
  %v189 = vld [vmem:[%s1 + $0x520] sm:$0xff]
  %v190 = vld [vmem:[%s1 + $0x528] sm:$0xff]
  %v191 = vld [vmem:[%s1 + $0x530] sm:$0xff]
  %v192 = vld [vmem:[%s1 + $0x538] sm:$0xff]
  %v193 = vld [vmem:[%s1 + $0x540] sm:$0xff]
  %v194 = vld [vmem:[%s1 + $0x548] sm:$0xff]
  %v195 = vld [vmem:[%s1 + $0x550] sm:$0xff]
  %v196 = vld [vmem:[%s1 + $0x558] sm:$0xff]
  %v197 = vld [vmem:[%s1 + $0x560] sm:$0xff]
  %v198 = vld [vmem:[%s1 + $0x568] sm:$0xff]
  %v199 = vld [vmem:[%s1 + $0x570] sm:$0xff]
  %v200 = vld [vmem:[%s1 + $0x578] sm:$0xff]
  %v201 = vld [vmem:[%s1 + $0x580] sm:$0xff]
  %v202 = vld [vmem:[%s1 + $0x588] sm:$0xff]
  %v203 = vld [vmem:[%s1 + $0x590] sm:$0xff]
  %v204 = vld [vmem:[%s1 + $0x598] sm:$0xff]
  %v205 = vld [vmem:[%s1 + $0x5a0] sm:$0xff]
  %v206 = vld [vmem:[%s1 + $0x5a8] sm:$0xff]
  %v207 = vld [vmem:[%s1 + $0x5b0] sm:$0xff]
  %v208 = vld [vmem:[%s1 + $0x5b8] sm:$0xff]
  %v209 = vld [vmem:[%s1 + $0x5c0] sm:$0xff]
  %v210 = vld [vmem:[%s1 + $0x5c8] sm:$0xff]
  %v211 = vld [vmem:[%s1 + $0x5d0] sm:$0xff]
  %v212 = vld [vmem:[%s1 + $0x5d8] sm:$0xff]
  %v213 = vld [vmem:[%s1 + $0x5e0] sm:$0xff]
  %v214 = vld [vmem:[%s1 + $0x5e8] sm:$0xff]
  %v215 = vld [vmem:[%s1 + $0x5f0] sm:$0xff]
  %v216 = vld [vmem:[%s1 + $0x5f8] sm:$0xff]
  %v217 = vld [vmem:[%s1 + $0x600] sm:$0xff]
  %v218 = vld [vmem:[%s1 + $0x608] sm:$0xff]
  %v219 = vld [vmem:[%s1 + $0x610] sm:$0xff]
  %v220 = vld [vmem:[%s1 + $0x618] sm:$0xff]
  %v221 = vld [vmem:[%s1 + $0x620] sm:$0xff]
  %v222 = vld [vmem:[%s1 + $0x628] sm:$0xff]
  %v223 = vld [vmem:[%s1 + $0x630] sm:$0xff]
  %v224 = vld [vmem:[%s1 + $0x638] sm:$0xff]
  %v225 = vld [vmem:[%s1 + $0x640] sm:$0xff]
  %v226 = vld [vmem:[%s1 + $0x648] sm:$0xff]
  %v227 = vld [vmem:[%s1 + $0x650] sm:$0xff]
  %v228 = vld [vmem:[%s1 + $0x658] sm:$0xff]
  %v229 = vld [vmem:[%s1 + $0x660] sm:$0xff]
  %v230 = vld [vmem:[%s1 + $0x668] sm:$0xff]
  %v231 = vld [vmem:[%s1 + $0x670] sm:$0xff]
  %v232 = vld [vmem:[%s1 + $0x678] sm:$0xff]
  %v233 = vld [vmem:[%s1 + $0x680] sm:$0xff]
  %v234 = vld [vmem:[%s1 + $0x688] sm:$0xff]
  %v235 = vld [vmem:[%s1 + $0x690] sm:$0xff]
  %v236 = vld [vmem:[%s1 + $0x698] sm:$0xff]
  %v237 = vld [vmem:[%s1 + $0x6a0] sm:$0xff]
  %v238 = vld [vmem:[%s1 + $0x6a8] sm:$0xff]
  %v239 = vld [vmem:[%s1 + $0x6b0] sm:$0xff]
  %v240 = vld [vmem:[%s1 + $0x6b8] sm:$0xff]
  %v241 = vld [vmem:[%s1 + $0x6c0] sm:$0xff]
  %v242 = vld [vmem:[%s1 + $0x6c8] sm:$0xff]
  %v243 = vld [vmem:[%s1 + $0x6d0] sm:$0xff]
  %v244 = vld [vmem:[%s1 + $0x6d8] sm:$0xff]
  %v245 = vld [vmem:[%s1 + $0x6e0] sm:$0xff]
  %v246 = vld [vmem:[%s1 + $0x6e8] sm:$0xff]
  %v247 = vld [vmem:[%s1 + $0x6f0] sm:$0xff]
  %v248 = vld [vmem:[%s1 + $0x6f8] sm:$0xff]
  %v249 = vld [vmem:[%s1 + $0x700] sm:$0xff]
  %v250 = vld [vmem:[%s1 + $0x708] sm:$0xff]
  %v251 = vld [vmem:[%s1 + $0x710] sm:$0xff]
  %v252 = vld [vmem:[%s1 + $0x718] sm:$0xff]
  %v253 = vld [vmem:[%s1 + $0x720] sm:$0xff]
  %v254 = vld [vmem:[%s1 + $0x728] sm:$0xff]
  %v255 = vld [vmem:[%s1 + $0x730] sm:$0xff]
  %v256 = vld [vmem:[%s1 + $0x738] sm:$0xff]
  %v257 = vld [vmem:[%s1 + $0x740] sm:$0xff]
  %v258 = vld [vmem:[%s1 + $0x748] sm:$0xff]
  %v259 = vld [vmem:[%s1 + $0x750] sm:$0xff]
  %v260 = vld [vmem:[%s1 + $0x758] sm:$0xff]
  %v261 = vld [vmem:[%s1 + $0x760] sm:$0xff]
  %v262 = vld [vmem:[%s1 + $0x768] sm:$0xff]
  %v263 = vld [vmem:[%s1 + $0x770] sm:$0xff]
  %v264 = vld [vmem:[%s1 + $0x778] sm:$0xff]
  %v265 = vld [vmem:[%s1 + $0x780] sm:$0xff]
  %v266 = vld [vmem:[%s1 + $0x788] sm:$0xff]
  %v267 = vld [vmem:[%s1 + $0x790] sm:$0xff]
  %v268 = vld [vmem:[%s1 + $0x798] sm:$0xff]
  %v269 = vld [vmem:[%s1 + $0x7a0] sm:$0xff]
  %v270 = vld [vmem:[%s1 + $0x7a8] sm:$0xff]
  %v271 = vld [vmem:[%s1 + $0x7b0] sm:$0xff]
  %v272 = vld [vmem:[%s1 + $0x7b8] sm:$0xff]
  %v273 = vld [vmem:[%s1 + $0x7c0] sm:$0xff]
  %v274 = vld [vmem:[%s1 + $0x7c8] sm:$0xff]
  %v275 = vld [vmem:[%s1 + $0x7d0] sm:$0xff]
  %v276 = vld [vmem:[%s1 + $0x7d8] sm:$0xff]
  %v277 = vld [vmem:[%s1 + $0x7e0] sm:$0xff]
  %v278 = vld [vmem:[%s1 + $0x7e8] sm:$0xff]
  %v279 = vld [vmem:[%s1 + $0x7f0] sm:$0xff]
  %v280 = vld [vmem:[%s1 + $0x7f8] sm:$0xff]
  %v281 = vld [vmem:[%s1 + $0x800] sm:$0xff]
  %v282 = vld [vmem:[%s1 + $0x808] sm:$0xff]
  %v283 = vld [vmem:[%s1 + $0x810] sm:$0xff]
  %v284 = vld [vmem:[%s1 + $0x818] sm:$0xff]
  %v285 = vld [vmem:[%s1 + $0x820] sm:$0xff]
  %v286 = vld [vmem:[%s1 + $0x828] sm:$0xff]
  %v287 = vld [vmem:[%s1 + $0x830] sm:$0xff]
  %v288 = vld [vmem:[%s1 + $0x838] sm:$0xff]
  %v289 = vld [vmem:[%s1 + $0x840] sm:$0xff]
  %v290 = vld [vmem:[%s1 + $0x848] sm:$0xff]
  %v291 = vld [vmem:[%s1 + $0x850] sm:$0xff]
  %v292 = vld [vmem:[%s1 + $0x858] sm:$0xff]
  %v293 = vld [vmem:[%s1 + $0x860] sm:$0xff]
  %v294 = vld [vmem:[%s1 + $0x868] sm:$0xff]
  %v295 = vld [vmem:[%s1 + $0x870] sm:$0xff]
  %v296 = vld [vmem:[%s1 + $0x878] sm:$0xff]
  %v297 = vld [vmem:[%s1 + $0x880] sm:$0xff]
  %v298 = vld [vmem:[%s1 + $0x888] sm:$0xff]
  %v299 = vld [vmem:[%s1 + $0x890] sm:$0xff]
  %v300 = vld [vmem:[%s1 + $0x898] sm:$0xff]
  %v301 = vld [vmem:[%s1 + $0x8a0] sm:$0xff]
  %v302 = vld [vmem:[%s1 + $0x8a8] sm:$0xff]
  %v303 = vld [vmem:[%s1 + $0x8b0] sm:$0xff]
  %v304 = vld [vmem:[%s1 + $0x8b8] sm:$0xff]
  %v305 = vld [vmem:[%s1 + $0x8c0] sm:$0xff]
  %v306 = vld [vmem:[%s1 + $0x8c8] sm:$0xff]
  %v307 = vld [vmem:[%s1 + $0x8d0] sm:$0xff]
  %v308 = vld [vmem:[%s1 + $0x8d8] sm:$0xff]
  %v309 = vld [vmem:[%s1 + $0x8e0] sm:$0xff]
  %v310 = vld [vmem:[%s1 + $0x8e8] sm:$0xff]
  %v311 = vld [vmem:[%s1 + $0x8f0] sm:$0xff]
  %v312 = vld [vmem:[%s1 + $0x8f8] sm:$0xff]
  %v313 = vld [vmem:[%s2] sm:$0x3f]
  %v315 = vperm.slane %v313, 0
  %v316 = vperm.slane %v313, 1
  %v317 = vperm.slane %v313, 2
  %v318 = vperm.slane %v313, 3
  %v319 = vperm.slane %v313, 4
  %v320 = vperm.slane %v313, 5
  %v330 = vunpack.c.l.b16 %v22
  %v331 = vunpack.c.h.b16 %v22
  %v332 = vunpack.c.l.b16 %v23
  %v333 = vunpack.c.h.b16 %v23
  %v334 = vunpack.c.l.b16 %v24
  %v335 = vunpack.c.h.b16 %v24
  %v336 = vpack.c.b16 %v330, %v330
  %v337 = vpack.c.b16 %v331, %v331
  %v338 = vpack.c.b16 %v332, %v332
  %v339 = vpack.c.b16 %v333, %v333
  %v340 = vpack.c.b16 %v334, %v334
  %v341 = vpack.c.b16 %v335, %v335
  %v636 = vunpack.c.l.b16 %v25
  %v637 = vunpack.c.h.b16 %v25
  %v638 = vunpack.c.l.b16 %v26
  %v639 = vunpack.c.h.b16 %v26
  %v640 = vunpack.c.l.b16 %v27
  %v641 = vunpack.c.h.b16 %v27
  %v642 = vunpack.c.l.b16 %v28
  %v643 = vunpack.c.h.b16 %v28
  %v644 = vunpack.c.l.b16 %v29
  %v645 = vunpack.c.h.b16 %v29
  %v646 = vunpack.c.l.b16 %v30
  %v647 = vunpack.c.h.b16 %v30
  %v648 = vunpack.c.l.b16 %v31
  %v649 = vunpack.c.h.b16 %v31
  %v650 = vunpack.c.l.b16 %v32
  %v651 = vunpack.c.h.b16 %v32
  %v652 = vunpack.c.l.b16 %v33
  %v653 = vunpack.c.h.b16 %v33
  %v654 = vunpack.c.l.b16 %v34
  %v655 = vunpack.c.h.b16 %v34
  %v656 = vunpack.c.l.b16 %v35
  %v657 = vunpack.c.h.b16 %v35
  %v658 = vunpack.c.l.b16 %v36
  %v659 = vunpack.c.h.b16 %v36
  %v660 = vunpack.c.l.b16 %v37
  %v661 = vunpack.c.h.b16 %v37
  %v662 = vunpack.c.l.b16 %v38
  %v663 = vunpack.c.h.b16 %v38
  %v664 = vunpack.c.l.b16 %v39
  %v665 = vunpack.c.h.b16 %v39
  %v666 = vunpack.c.l.b16 %v40
  %v667 = vunpack.c.h.b16 %v40
  %v668 = vunpack.c.l.b16 %v41
  %v669 = vunpack.c.h.b16 %v41
  %v670 = vunpack.c.l.b16 %v42
  %v671 = vunpack.c.h.b16 %v42
  %v672 = vunpack.c.l.b16 %v43
  %v673 = vunpack.c.h.b16 %v43
  %v674 = vunpack.c.l.b16 %v44
  %v675 = vunpack.c.h.b16 %v44
  %v676 = vunpack.c.l.b16 %v45
  %v677 = vunpack.c.h.b16 %v45
  %v678 = vunpack.c.l.b16 %v46
  %v679 = vunpack.c.h.b16 %v46
  %v680 = vunpack.c.l.b16 %v47
  %v681 = vunpack.c.h.b16 %v47
  %v682 = vunpack.c.l.b16 %v48
  %v683 = vunpack.c.h.b16 %v48
  %v684 = vunpack.c.l.b16 %v49
  %v685 = vunpack.c.h.b16 %v49
  %v686 = vunpack.c.l.b16 %v50
  %v687 = vunpack.c.h.b16 %v50
  %v688 = vunpack.c.l.b16 %v51
  %v689 = vunpack.c.h.b16 %v51
  %v690 = vunpack.c.l.b16 %v52
  %v691 = vunpack.c.h.b16 %v52
  %v692 = vunpack.c.l.b16 %v53
  %v693 = vunpack.c.h.b16 %v53
  %v694 = vunpack.c.l.b16 %v54
  %v695 = vunpack.c.h.b16 %v54
  %v696 = vunpack.c.l.b16 %v55
  %v697 = vunpack.c.h.b16 %v55
  %v698 = vunpack.c.l.b16 %v56
  %v699 = vunpack.c.h.b16 %v56
  %v700 = vunpack.c.l.b16 %v57
  %v701 = vunpack.c.h.b16 %v57
  %v702 = vunpack.c.l.b16 %v58
  %v703 = vunpack.c.h.b16 %v58
  %v704 = vunpack.c.l.b16 %v59
  %v705 = vunpack.c.h.b16 %v59
  %v706 = vunpack.c.l.b16 %v60
  %v707 = vunpack.c.h.b16 %v60
  %v708 = vunpack.c.l.b16 %v61
  %v709 = vunpack.c.h.b16 %v61
  %v710 = vunpack.c.l.b16 %v62
  %v711 = vunpack.c.h.b16 %v62
  %v712 = vunpack.c.l.b16 %v63
  %v713 = vunpack.c.h.b16 %v63
  %v714 = vunpack.c.l.b16 %v64
  %v715 = vunpack.c.h.b16 %v64
  %v716 = vunpack.c.l.b16 %v65
  %v717 = vunpack.c.h.b16 %v65
  %v718 = vunpack.c.l.b16 %v66
  %v719 = vunpack.c.h.b16 %v66
  %v720 = vunpack.c.l.b16 %v67
  %v721 = vunpack.c.h.b16 %v67
  %v722 = vunpack.c.l.b16 %v68
  %v723 = vunpack.c.h.b16 %v68
  %v724 = vunpack.c.l.b16 %v69
  %v725 = vunpack.c.h.b16 %v69
  %v726 = vunpack.c.l.b16 %v70
  %v727 = vunpack.c.h.b16 %v70
  %v728 = vunpack.c.l.b16 %v71
  %v729 = vunpack.c.h.b16 %v71
  %v730 = vunpack.c.l.b16 %v72
  %v731 = vunpack.c.h.b16 %v72
  %v732 = vunpack.c.l.b16 %v73
  %v733 = vunpack.c.h.b16 %v73
  %v734 = vunpack.c.l.b16 %v74
  %v735 = vunpack.c.h.b16 %v74
  %v736 = vunpack.c.l.b16 %v75
  %v737 = vunpack.c.h.b16 %v75
  %v738 = vunpack.c.l.b16 %v76
  %v739 = vunpack.c.h.b16 %v76
  %v740 = vunpack.c.l.b16 %v77
  %v741 = vunpack.c.h.b16 %v77
  %v742 = vunpack.c.l.b16 %v78
  %v743 = vunpack.c.h.b16 %v78
  %v744 = vunpack.c.l.b16 %v79
  %v745 = vunpack.c.h.b16 %v79
  %v746 = vunpack.c.l.b16 %v80
  %v747 = vunpack.c.h.b16 %v80
  %v748 = vunpack.c.l.b16 %v81
  %v749 = vunpack.c.h.b16 %v81
  %v750 = vunpack.c.l.b16 %v82
  %v751 = vunpack.c.h.b16 %v82
  %v752 = vunpack.c.l.b16 %v83
  %v753 = vunpack.c.h.b16 %v83
  %v754 = vunpack.c.l.b16 %v84
  %v755 = vunpack.c.h.b16 %v84
  %v756 = vunpack.c.l.b16 %v85
  %v757 = vunpack.c.h.b16 %v85
  %v758 = vunpack.c.l.b16 %v86
  %v759 = vunpack.c.h.b16 %v86
  %v760 = vunpack.c.l.b16 %v87
  %v761 = vunpack.c.h.b16 %v87
  %v762 = vunpack.c.l.b16 %v88
  %v763 = vunpack.c.h.b16 %v88
  %v764 = vunpack.c.l.b16 %v89
  %v765 = vunpack.c.h.b16 %v89
  %v766 = vunpack.c.l.b16 %v90
  %v767 = vunpack.c.h.b16 %v90
  %v768 = vunpack.c.l.b16 %v91
  %v769 = vunpack.c.h.b16 %v91
  %v770 = vunpack.c.l.b16 %v92
  %v771 = vunpack.c.h.b16 %v92
  %v772 = vunpack.c.l.b16 %v93
  %v773 = vunpack.c.h.b16 %v93
  %v774 = vunpack.c.l.b16 %v94
  %v775 = vunpack.c.h.b16 %v94
  %v776 = vunpack.c.l.b16 %v95
  %v777 = vunpack.c.h.b16 %v95
  %v778 = vunpack.c.l.b16 %v96
  %v779 = vunpack.c.h.b16 %v96
  %v780 = vunpack.c.l.b16 %v97
  %v781 = vunpack.c.h.b16 %v97
  %v782 = vunpack.c.l.b16 %v98
  %v783 = vunpack.c.h.b16 %v98
  %v784 = vunpack.c.l.b16 %v99
  %v785 = vunpack.c.h.b16 %v99
  %v786 = vunpack.c.l.b16 %v100
  %v787 = vunpack.c.h.b16 %v100
  %v788 = vunpack.c.l.b16 %v101
  %v789 = vunpack.c.h.b16 %v101
  %v790 = vunpack.c.l.b16 %v102
  %v791 = vunpack.c.h.b16 %v102
  %v792 = vunpack.c.l.b16 %v103
  %v793 = vunpack.c.h.b16 %v103
  %v794 = vunpack.c.l.b16 %v104
  %v795 = vunpack.c.h.b16 %v104
  %v796 = vunpack.c.l.b16 %v105
  %v797 = vunpack.c.h.b16 %v105
  %v798 = vunpack.c.l.b16 %v106
  %v799 = vunpack.c.h.b16 %v106
  %v800 = vunpack.c.l.b16 %v107
  %v801 = vunpack.c.h.b16 %v107
  %v802 = vunpack.c.l.b16 %v108
  %v803 = vunpack.c.h.b16 %v108
  %v804 = vunpack.c.l.b16 %v109
  %v805 = vunpack.c.h.b16 %v109
  %v806 = vunpack.c.l.b16 %v110
  %v807 = vunpack.c.h.b16 %v110
  %v808 = vunpack.c.l.b16 %v111
  %v809 = vunpack.c.h.b16 %v111
  %v810 = vunpack.c.l.b16 %v112
  %v811 = vunpack.c.h.b16 %v112
  %v812 = vunpack.c.l.b16 %v113
  %v813 = vunpack.c.h.b16 %v113
  %v814 = vunpack.c.l.b16 %v114
  %v815 = vunpack.c.h.b16 %v114
  %v816 = vunpack.c.l.b16 %v115
  %v817 = vunpack.c.h.b16 %v115
  %v818 = vunpack.c.l.b16 %v116
  %v819 = vunpack.c.h.b16 %v116
  %v820 = vunpack.c.l.b16 %v117
  %v821 = vunpack.c.h.b16 %v117
  %v822 = vunpack.c.l.b16 %v118
  %v823 = vunpack.c.h.b16 %v118
  %v824 = vunpack.c.l.b16 %v119
  %v825 = vunpack.c.h.b16 %v119
  %v826 = vunpack.c.l.b16 %v120
  %v827 = vunpack.c.h.b16 %v120
  %v828 = vunpack.c.l.b16 %v121
  %v829 = vunpack.c.h.b16 %v121
  %v830 = vunpack.c.l.b16 %v122
  %v831 = vunpack.c.h.b16 %v122
  %v832 = vunpack.c.l.b16 %v123
  %v833 = vunpack.c.h.b16 %v123
  %v834 = vunpack.c.l.b16 %v124
  %v835 = vunpack.c.h.b16 %v124
  %v836 = vunpack.c.l.b16 %v125
  %v837 = vunpack.c.h.b16 %v125
  %v838 = vunpack.c.l.b16 %v126
  %v839 = vunpack.c.h.b16 %v126
  %v840 = vunpack.c.l.b16 %v127
  %v841 = vunpack.c.h.b16 %v127
  %v842 = vunpack.c.l.b16 %v128
  %v843 = vunpack.c.h.b16 %v128
  %v844 = vunpack.c.l.b16 %v129
  %v845 = vunpack.c.h.b16 %v129
  %v846 = vunpack.c.l.b16 %v130
  %v847 = vunpack.c.h.b16 %v130
  %v848 = vunpack.c.l.b16 %v131
  %v849 = vunpack.c.h.b16 %v131
  %v850 = vunpack.c.l.b16 %v132
  %v851 = vunpack.c.h.b16 %v132
  %v852 = vunpack.c.l.b16 %v133
  %v853 = vunpack.c.h.b16 %v133
  %v854 = vunpack.c.l.b16 %v134
  %v855 = vunpack.c.h.b16 %v134
  %v856 = vunpack.c.l.b16 %v135
  %v857 = vunpack.c.h.b16 %v135
  %v858 = vunpack.c.l.b16 %v136
  %v859 = vunpack.c.h.b16 %v136
  %v860 = vunpack.c.l.b16 %v137
  %v861 = vunpack.c.h.b16 %v137
  %v862 = vunpack.c.l.b16 %v138
  %v863 = vunpack.c.h.b16 %v138
  %v864 = vunpack.c.l.b16 %v139
  %v865 = vunpack.c.h.b16 %v139
  %v866 = vunpack.c.l.b16 %v140
  %v867 = vunpack.c.h.b16 %v140
  %v868 = vunpack.c.l.b16 %v141
  %v869 = vunpack.c.h.b16 %v141
  %v870 = vunpack.c.l.b16 %v142
  %v871 = vunpack.c.h.b16 %v142
  %v872 = vunpack.c.l.b16 %v143
  %v873 = vunpack.c.h.b16 %v143
  %v874 = vunpack.c.l.b16 %v144
  %v875 = vunpack.c.h.b16 %v144
  %v876 = vunpack.c.l.b16 %v145
  %v877 = vunpack.c.h.b16 %v145
  %v878 = vunpack.c.l.b16 %v146
  %v879 = vunpack.c.h.b16 %v146
  %v880 = vunpack.c.l.b16 %v147
  %v881 = vunpack.c.h.b16 %v147
  %v882 = vunpack.c.l.b16 %v148
  %v883 = vunpack.c.h.b16 %v148
  %v884 = vunpack.c.l.b16 %v149
  %v885 = vunpack.c.h.b16 %v149
  %v886 = vunpack.c.l.b16 %v150
  %v887 = vunpack.c.h.b16 %v150
  %v888 = vunpack.c.l.b16 %v151
  %v889 = vunpack.c.h.b16 %v151
  %v890 = vunpack.c.l.b16 %v152
  %v891 = vunpack.c.h.b16 %v152
  %v892 = vunpack.c.l.b16 %v153
  %v893 = vunpack.c.h.b16 %v153
  %v894 = vunpack.c.l.b16 %v154
  %v895 = vunpack.c.h.b16 %v154
  %v896 = vunpack.c.l.b16 %v155
  %v897 = vunpack.c.h.b16 %v155
  %v898 = vunpack.c.l.b16 %v156
  %v899 = vunpack.c.h.b16 %v156
  %v900 = vunpack.c.l.b16 %v157
  %v901 = vunpack.c.h.b16 %v157
  %v902 = vunpack.c.l.b16 %v158
  %v903 = vunpack.c.h.b16 %v158
  %v904 = vunpack.c.l.b16 %v159
  %v905 = vunpack.c.h.b16 %v159
  %v906 = vunpack.c.l.b16 %v160
  %v907 = vunpack.c.h.b16 %v160
  %v908 = vunpack.c.l.b16 %v161
  %v909 = vunpack.c.h.b16 %v161
  %v910 = vunpack.c.l.b16 %v162
  %v911 = vunpack.c.h.b16 %v162
  %v912 = vunpack.c.l.b16 %v163
  %v913 = vunpack.c.h.b16 %v163
  %v914 = vunpack.c.l.b16 %v164
  %v915 = vunpack.c.h.b16 %v164
  %v916 = vunpack.c.l.b16 %v165
  %v917 = vunpack.c.h.b16 %v165
  %v918 = vunpack.c.l.b16 %v166
  %v919 = vunpack.c.h.b16 %v166
  %v920 = vunpack.c.l.b16 %v167
  %v921 = vunpack.c.h.b16 %v167
  %v922 = vunpack.c.l.b16 %v168
  %v923 = vunpack.c.h.b16 %v168
  %v924 = vunpack.c.l.b16 %v169
  %v925 = vunpack.c.h.b16 %v169
  %v926 = vunpack.c.l.b16 %v170
  %v927 = vunpack.c.h.b16 %v170
  %v928 = vunpack.c.l.b16 %v171
  %v929 = vunpack.c.h.b16 %v171
  %v930 = vunpack.c.l.b16 %v172
  %v931 = vunpack.c.h.b16 %v172
  %v932 = vunpack.c.l.b16 %v173
  %v933 = vunpack.c.h.b16 %v173
  %v934 = vunpack.c.l.b16 %v174
  %v935 = vunpack.c.h.b16 %v174
  %v936 = vunpack.c.l.b16 %v175
  %v937 = vunpack.c.h.b16 %v175
  %v938 = vunpack.c.l.b16 %v176
  %v939 = vunpack.c.h.b16 %v176
  %v940 = vunpack.c.l.b16 %v177
  %v941 = vunpack.c.h.b16 %v177
  %v942 = vunpack.c.l.b16 %v178
  %v943 = vunpack.c.h.b16 %v178
  %v944 = vunpack.c.l.b16 %v179
  %v945 = vunpack.c.h.b16 %v179
  %v946 = vunpack.c.l.b16 %v180
  %v947 = vunpack.c.h.b16 %v180
  %v948 = vunpack.c.l.b16 %v181
  %v949 = vunpack.c.h.b16 %v181
  %v950 = vunpack.c.l.b16 %v182
  %v951 = vunpack.c.h.b16 %v182
  %v952 = vunpack.c.l.b16 %v183
  %v953 = vunpack.c.h.b16 %v183
  %v954 = vunpack.c.l.b16 %v184
  %v955 = vunpack.c.h.b16 %v184
  %v956 = vunpack.c.l.b16 %v185
  %v957 = vunpack.c.h.b16 %v185
  %v958 = vunpack.c.l.b16 %v186
  %v959 = vunpack.c.h.b16 %v186
  %v960 = vunpack.c.l.b16 %v187
  %v961 = vunpack.c.h.b16 %v187
  %v962 = vunpack.c.l.b16 %v188
  %v963 = vunpack.c.h.b16 %v188
  %v964 = vunpack.c.l.b16 %v189
  %v965 = vunpack.c.h.b16 %v189
  %v966 = vunpack.c.l.b16 %v190
  %v967 = vunpack.c.h.b16 %v190
  %v968 = vunpack.c.l.b16 %v191
  %v969 = vunpack.c.h.b16 %v191
  %v970 = vunpack.c.l.b16 %v192
  %v971 = vunpack.c.h.b16 %v192
  %v972 = vunpack.c.l.b16 %v193
  %v973 = vunpack.c.h.b16 %v193
  %v974 = vunpack.c.l.b16 %v194
  %v975 = vunpack.c.h.b16 %v194
  %v976 = vunpack.c.l.b16 %v195
  %v977 = vunpack.c.h.b16 %v195
  %v978 = vunpack.c.l.b16 %v196
  %v979 = vunpack.c.h.b16 %v196
  %v980 = vunpack.c.l.b16 %v197
  %v981 = vunpack.c.h.b16 %v197
  %v982 = vunpack.c.l.b16 %v198
  %v983 = vunpack.c.h.b16 %v198
  %v984 = vunpack.c.l.b16 %v199
  %v985 = vunpack.c.h.b16 %v199
  %v986 = vunpack.c.l.b16 %v200
  %v987 = vunpack.c.h.b16 %v200
  %v988 = vunpack.c.l.b16 %v201
  %v989 = vunpack.c.h.b16 %v201
  %v990 = vunpack.c.l.b16 %v202
  %v991 = vunpack.c.h.b16 %v202
  %v992 = vunpack.c.l.b16 %v203
  %v993 = vunpack.c.h.b16 %v203
  %v994 = vunpack.c.l.b16 %v204
  %v995 = vunpack.c.h.b16 %v204
  %v996 = vunpack.c.l.b16 %v205
  %v997 = vunpack.c.h.b16 %v205
  %v998 = vunpack.c.l.b16 %v206
  %v999 = vunpack.c.h.b16 %v206
  %v1000 = vunpack.c.l.b16 %v207
  %v1001 = vunpack.c.h.b16 %v207
  %v1002 = vunpack.c.l.b16 %v208
  %v1003 = vunpack.c.h.b16 %v208
  %v1004 = vunpack.c.l.b16 %v209
  %v1005 = vunpack.c.h.b16 %v209
  %v1006 = vunpack.c.l.b16 %v210
  %v1007 = vunpack.c.h.b16 %v210
  %v1008 = vunpack.c.l.b16 %v211
  %v1009 = vunpack.c.h.b16 %v211
  %v1010 = vunpack.c.l.b16 %v212
  %v1011 = vunpack.c.h.b16 %v212
  %v1012 = vunpack.c.l.b16 %v213
  %v1013 = vunpack.c.h.b16 %v213
  %v1014 = vunpack.c.l.b16 %v214
  %v1015 = vunpack.c.h.b16 %v214
  %v1016 = vunpack.c.l.b16 %v215
  %v1017 = vunpack.c.h.b16 %v215
  %v1018 = vunpack.c.l.b16 %v216
  %v1019 = vunpack.c.h.b16 %v216
  %v1020 = vunpack.c.l.b16 %v217
  %v1021 = vunpack.c.h.b16 %v217
  %v1022 = vunpack.c.l.b16 %v218
  %v1023 = vunpack.c.h.b16 %v218
  %v1024 = vunpack.c.l.b16 %v219
  %v1025 = vunpack.c.h.b16 %v219
  %v1026 = vunpack.c.l.b16 %v220
  %v1027 = vunpack.c.h.b16 %v220
  %v1028 = vunpack.c.l.b16 %v221
  %v1029 = vunpack.c.h.b16 %v221
  %v1030 = vunpack.c.l.b16 %v222
  %v1031 = vunpack.c.h.b16 %v222
  %v1032 = vunpack.c.l.b16 %v223
  %v1033 = vunpack.c.h.b16 %v223
  %v1034 = vunpack.c.l.b16 %v224
  %v1035 = vunpack.c.h.b16 %v224
  %v1036 = vunpack.c.l.b16 %v225
  %v1037 = vunpack.c.h.b16 %v225
  %v1038 = vunpack.c.l.b16 %v226
  %v1039 = vunpack.c.h.b16 %v226
  %v1040 = vunpack.c.l.b16 %v227
  %v1041 = vunpack.c.h.b16 %v227
  %v1042 = vunpack.c.l.b16 %v228
  %v1043 = vunpack.c.h.b16 %v228
  %v1044 = vunpack.c.l.b16 %v229
  %v1045 = vunpack.c.h.b16 %v229
  %v1046 = vunpack.c.l.b16 %v230
  %v1047 = vunpack.c.h.b16 %v230
  %v1048 = vunpack.c.l.b16 %v231
  %v1049 = vunpack.c.h.b16 %v231
  %v1050 = vunpack.c.l.b16 %v232
  %v1051 = vunpack.c.h.b16 %v232
  %v1052 = vunpack.c.l.b16 %v233
  %v1053 = vunpack.c.h.b16 %v233
  %v1054 = vunpack.c.l.b16 %v234
  %v1055 = vunpack.c.h.b16 %v234
  %v1056 = vunpack.c.l.b16 %v235
  %v1057 = vunpack.c.h.b16 %v235
  %v1058 = vunpack.c.l.b16 %v236
  %v1059 = vunpack.c.h.b16 %v236
  %v1060 = vunpack.c.l.b16 %v237
  %v1061 = vunpack.c.h.b16 %v237
  %v1062 = vunpack.c.l.b16 %v238
  %v1063 = vunpack.c.h.b16 %v238
  %v1064 = vunpack.c.l.b16 %v239
  %v1065 = vunpack.c.h.b16 %v239
  %v1066 = vunpack.c.l.b16 %v240
  %v1067 = vunpack.c.h.b16 %v240
  %v1068 = vunpack.c.l.b16 %v241
  %v1069 = vunpack.c.h.b16 %v241
  %v1070 = vunpack.c.l.b16 %v242
  %v1071 = vunpack.c.h.b16 %v242
  %v1072 = vunpack.c.l.b16 %v243
  %v1073 = vunpack.c.h.b16 %v243
  %v1074 = vunpack.c.l.b16 %v244
  %v1075 = vunpack.c.h.b16 %v244
  %v1076 = vunpack.c.l.b16 %v245
  %v1077 = vunpack.c.h.b16 %v245
  %v1078 = vunpack.c.l.b16 %v246
  %v1079 = vunpack.c.h.b16 %v246
  %v1080 = vunpack.c.l.b16 %v247
  %v1081 = vunpack.c.h.b16 %v247
  %v1082 = vunpack.c.l.b16 %v248
  %v1083 = vunpack.c.h.b16 %v248
  %v1084 = vunpack.c.l.b16 %v249
  %v1085 = vunpack.c.h.b16 %v249
  %v1086 = vunpack.c.l.b16 %v250
  %v1087 = vunpack.c.h.b16 %v250
  %v1088 = vunpack.c.l.b16 %v251
  %v1089 = vunpack.c.h.b16 %v251
  %v1090 = vunpack.c.l.b16 %v252
  %v1091 = vunpack.c.h.b16 %v252
  %v1092 = vunpack.c.l.b16 %v253
  %v1093 = vunpack.c.h.b16 %v253
  %v1094 = vunpack.c.l.b16 %v254
  %v1095 = vunpack.c.h.b16 %v254
  %v1096 = vunpack.c.l.b16 %v255
  %v1097 = vunpack.c.h.b16 %v255
  %v1098 = vunpack.c.l.b16 %v256
  %v1099 = vunpack.c.h.b16 %v256
  %v1100 = vunpack.c.l.b16 %v257
  %v1101 = vunpack.c.h.b16 %v257
  %v1102 = vunpack.c.l.b16 %v258
  %v1103 = vunpack.c.h.b16 %v258
  %v1104 = vunpack.c.l.b16 %v259
  %v1105 = vunpack.c.h.b16 %v259
  %v1106 = vunpack.c.l.b16 %v260
  %v1107 = vunpack.c.h.b16 %v260
  %v1108 = vunpack.c.l.b16 %v261
  %v1109 = vunpack.c.h.b16 %v261
  %v1110 = vunpack.c.l.b16 %v262
  %v1111 = vunpack.c.h.b16 %v262
  %v1112 = vunpack.c.l.b16 %v263
  %v1113 = vunpack.c.h.b16 %v263
  %v1114 = vunpack.c.l.b16 %v264
  %v1115 = vunpack.c.h.b16 %v264
  %v1116 = vunpack.c.l.b16 %v265
  %v1117 = vunpack.c.h.b16 %v265
  %v1118 = vunpack.c.l.b16 %v266
  %v1119 = vunpack.c.h.b16 %v266
  %v1120 = vunpack.c.l.b16 %v267
  %v1121 = vunpack.c.h.b16 %v267
  %v1122 = vunpack.c.l.b16 %v268
  %v1123 = vunpack.c.h.b16 %v268
  %v1124 = vunpack.c.l.b16 %v269
  %v1125 = vunpack.c.h.b16 %v269
  %v1126 = vunpack.c.l.b16 %v270
  %v1127 = vunpack.c.h.b16 %v270
  %v1128 = vunpack.c.l.b16 %v271
  %v1129 = vunpack.c.h.b16 %v271
  %v1130 = vunpack.c.l.b16 %v272
  %v1131 = vunpack.c.h.b16 %v272
  %v1132 = vunpack.c.l.b16 %v273
  %v1133 = vunpack.c.h.b16 %v273
  %v1134 = vunpack.c.l.b16 %v274
  %v1135 = vunpack.c.h.b16 %v274
  %v1136 = vunpack.c.l.b16 %v275
  %v1137 = vunpack.c.h.b16 %v275
  %v1138 = vunpack.c.l.b16 %v276
  %v1139 = vunpack.c.h.b16 %v276
  %v1140 = vunpack.c.l.b16 %v277
  %v1141 = vunpack.c.h.b16 %v277
  %v1142 = vunpack.c.l.b16 %v278
  %v1143 = vunpack.c.h.b16 %v278
  %v1144 = vunpack.c.l.b16 %v279
  %v1145 = vunpack.c.h.b16 %v279
  %v1146 = vunpack.c.l.b16 %v280
  %v1147 = vunpack.c.h.b16 %v280
  %v1148 = vunpack.c.l.b16 %v281
  %v1149 = vunpack.c.h.b16 %v281
  %v1150 = vunpack.c.l.b16 %v282
  %v1151 = vunpack.c.h.b16 %v282
  %v1152 = vunpack.c.l.b16 %v283
  %v1153 = vunpack.c.h.b16 %v283
  %v1154 = vunpack.c.l.b16 %v284
  %v1155 = vunpack.c.h.b16 %v284
  %v1156 = vunpack.c.l.b16 %v285
  %v1157 = vunpack.c.h.b16 %v285
  %v1158 = vunpack.c.l.b16 %v286
  %v1159 = vunpack.c.h.b16 %v286
  %v1160 = vunpack.c.l.b16 %v287
  %v1161 = vunpack.c.h.b16 %v287
  %v1162 = vunpack.c.l.b16 %v288
  %v1163 = vunpack.c.h.b16 %v288
  %v1164 = vunpack.c.l.b16 %v289
  %v1165 = vunpack.c.h.b16 %v289
  %v1166 = vunpack.c.l.b16 %v290
  %v1167 = vunpack.c.h.b16 %v290
  %v1168 = vunpack.c.l.b16 %v291
  %v1169 = vunpack.c.h.b16 %v291
  %v1170 = vunpack.c.l.b16 %v292
  %v1171 = vunpack.c.h.b16 %v292
  %v1172 = vunpack.c.l.b16 %v293
  %v1173 = vunpack.c.h.b16 %v293
  %v1174 = vunpack.c.l.b16 %v294
  %v1175 = vunpack.c.h.b16 %v294
  %v1176 = vunpack.c.l.b16 %v295
  %v1177 = vunpack.c.h.b16 %v295
  %v1178 = vunpack.c.l.b16 %v296
  %v1179 = vunpack.c.h.b16 %v296
  %v1180 = vunpack.c.l.b16 %v297
  %v1181 = vunpack.c.h.b16 %v297
  %v1182 = vunpack.c.l.b16 %v298
  %v1183 = vunpack.c.h.b16 %v298
  %v1184 = vunpack.c.l.b16 %v299
  %v1185 = vunpack.c.h.b16 %v299
  %v1186 = vunpack.c.l.b16 %v300
  %v1187 = vunpack.c.h.b16 %v300
  %v1188 = vunpack.c.l.b16 %v301
  %v1189 = vunpack.c.h.b16 %v301
  %v1190 = vunpack.c.l.b16 %v302
  %v1191 = vunpack.c.h.b16 %v302
  %v1192 = vunpack.c.l.b16 %v303
  %v1193 = vunpack.c.h.b16 %v303
  %v1194 = vunpack.c.l.b16 %v304
  %v1195 = vunpack.c.h.b16 %v304
  %v1196 = vunpack.c.l.b16 %v305
  %v1197 = vunpack.c.h.b16 %v305
  %v1198 = vunpack.c.l.b16 %v306
  %v1199 = vunpack.c.h.b16 %v306
  %v1200 = vunpack.c.l.b16 %v307
  %v1201 = vunpack.c.h.b16 %v307
  %v1202 = vunpack.c.l.b16 %v308
  %v1203 = vunpack.c.h.b16 %v308
  %v1204 = vunpack.c.l.b16 %v309
  %v1205 = vunpack.c.h.b16 %v309
  %v1206 = vunpack.c.l.b16 %v310
  %v1207 = vunpack.c.h.b16 %v310
  %v1208 = vunpack.c.l.b16 %v311
  %v1209 = vunpack.c.h.b16 %v311
  %v1210 = vunpack.c.l.b16 %v312
  %v1211 = vunpack.c.h.b16 %v312
  %v1212 = vpack.c.b16 %v642, %v636
  %v1213 = vpack.c.b16 %v643, %v637
  %v1214 = vpack.c.b16 %v644, %v638
  %v1215 = vpack.c.b16 %v645, %v639
  %v1216 = vpack.c.b16 %v646, %v640
  %v1217 = vpack.c.b16 %v647, %v641
  %v1218 = vpack.c.b16 %v654, %v648
  %v1219 = vpack.c.b16 %v655, %v649
  %v1220 = vpack.c.b16 %v656, %v650
  %v1221 = vpack.c.b16 %v657, %v651
  %v1222 = vpack.c.b16 %v658, %v652
  %v1223 = vpack.c.b16 %v659, %v653
  %v1224 = vpack.c.b16 %v666, %v660
  %v1225 = vpack.c.b16 %v667, %v661
  %v1226 = vpack.c.b16 %v668, %v662
  %v1227 = vpack.c.b16 %v669, %v663
  %v1228 = vpack.c.b16 %v670, %v664
  %v1229 = vpack.c.b16 %v671, %v665
  %v1230 = vpack.c.b16 %v678, %v672
  %v1231 = vpack.c.b16 %v679, %v673
  %v1232 = vpack.c.b16 %v680, %v674
  %v1233 = vpack.c.b16 %v681, %v675
  %v1234 = vpack.c.b16 %v682, %v676
  %v1235 = vpack.c.b16 %v683, %v677
  %v1236 = vpack.c.b16 %v690, %v684
  %v1237 = vpack.c.b16 %v691, %v685
  %v1238 = vpack.c.b16 %v692, %v686
  %v1239 = vpack.c.b16 %v693, %v687
  %v1240 = vpack.c.b16 %v694, %v688
  %v1241 = vpack.c.b16 %v695, %v689
  %v1242 = vpack.c.b16 %v702, %v696
  %v1243 = vpack.c.b16 %v703, %v697
  %v1244 = vpack.c.b16 %v704, %v698
  %v1245 = vpack.c.b16 %v705, %v699
  %v1246 = vpack.c.b16 %v706, %v700
  %v1247 = vpack.c.b16 %v707, %v701
  %v1248 = vpack.c.b16 %v714, %v708
  %v1249 = vpack.c.b16 %v715, %v709
  %v1250 = vpack.c.b16 %v716, %v710
  %v1251 = vpack.c.b16 %v717, %v711
  %v1252 = vpack.c.b16 %v718, %v712
  %v1253 = vpack.c.b16 %v719, %v713
  %v1254 = vpack.c.b16 %v726, %v720
  %v1255 = vpack.c.b16 %v727, %v721
  %v1256 = vpack.c.b16 %v728, %v722
  %v1257 = vpack.c.b16 %v729, %v723
  %v1258 = vpack.c.b16 %v730, %v724
  %v1259 = vpack.c.b16 %v731, %v725
  %v1260 = vpack.c.b16 %v738, %v732
  %v1261 = vpack.c.b16 %v739, %v733
  %v1262 = vpack.c.b16 %v740, %v734
  %v1263 = vpack.c.b16 %v741, %v735
  %v1264 = vpack.c.b16 %v742, %v736
  %v1265 = vpack.c.b16 %v743, %v737
  %v1266 = vpack.c.b16 %v750, %v744
  %v1267 = vpack.c.b16 %v751, %v745
  %v1268 = vpack.c.b16 %v752, %v746
  %v1269 = vpack.c.b16 %v753, %v747
  %v1270 = vpack.c.b16 %v754, %v748
  %v1271 = vpack.c.b16 %v755, %v749
  %v1272 = vpack.c.b16 %v762, %v756
  %v1273 = vpack.c.b16 %v763, %v757
  %v1274 = vpack.c.b16 %v764, %v758
  %v1275 = vpack.c.b16 %v765, %v759
  %v1276 = vpack.c.b16 %v766, %v760
  %v1277 = vpack.c.b16 %v767, %v761
  %v1278 = vpack.c.b16 %v774, %v768
  %v1279 = vpack.c.b16 %v775, %v769
  %v1280 = vpack.c.b16 %v776, %v770
  %v1281 = vpack.c.b16 %v777, %v771
  %v1282 = vpack.c.b16 %v778, %v772
  %v1283 = vpack.c.b16 %v779, %v773
  %v1284 = vpack.c.b16 %v786, %v780
  %v1285 = vpack.c.b16 %v787, %v781
  %v1286 = vpack.c.b16 %v788, %v782
  %v1287 = vpack.c.b16 %v789, %v783
  %v1288 = vpack.c.b16 %v790, %v784
  %v1289 = vpack.c.b16 %v791, %v785
  %v1290 = vpack.c.b16 %v798, %v792
  %v1291 = vpack.c.b16 %v799, %v793
  %v1292 = vpack.c.b16 %v800, %v794
  %v1293 = vpack.c.b16 %v801, %v795
  %v1294 = vpack.c.b16 %v802, %v796
  %v1295 = vpack.c.b16 %v803, %v797
  %v1296 = vpack.c.b16 %v810, %v804
  %v1297 = vpack.c.b16 %v811, %v805
  %v1298 = vpack.c.b16 %v812, %v806
  %v1299 = vpack.c.b16 %v813, %v807
  %v1300 = vpack.c.b16 %v814, %v808
  %v1301 = vpack.c.b16 %v815, %v809
  %v1302 = vpack.c.b16 %v822, %v816
  %v1303 = vpack.c.b16 %v823, %v817
  %v1304 = vpack.c.b16 %v824, %v818
  %v1305 = vpack.c.b16 %v825, %v819
  %v1306 = vpack.c.b16 %v826, %v820
  %v1307 = vpack.c.b16 %v827, %v821
  %v1308 = vpack.c.b16 %v834, %v828
  %v1309 = vpack.c.b16 %v835, %v829
  %v1310 = vpack.c.b16 %v836, %v830
  %v1311 = vpack.c.b16 %v837, %v831
  %v1312 = vpack.c.b16 %v838, %v832
  %v1313 = vpack.c.b16 %v839, %v833
  %v1314 = vpack.c.b16 %v846, %v840
  %v1315 = vpack.c.b16 %v847, %v841
  %v1316 = vpack.c.b16 %v848, %v842
  %v1317 = vpack.c.b16 %v849, %v843
  %v1318 = vpack.c.b16 %v850, %v844
  %v1319 = vpack.c.b16 %v851, %v845
  %v1320 = vpack.c.b16 %v858, %v852
  %v1321 = vpack.c.b16 %v859, %v853
  %v1322 = vpack.c.b16 %v860, %v854
  %v1323 = vpack.c.b16 %v861, %v855
  %v1324 = vpack.c.b16 %v862, %v856
  %v1325 = vpack.c.b16 %v863, %v857
  %v1326 = vpack.c.b16 %v870, %v864
  %v1327 = vpack.c.b16 %v871, %v865
  %v1328 = vpack.c.b16 %v872, %v866
  %v1329 = vpack.c.b16 %v873, %v867
  %v1330 = vpack.c.b16 %v874, %v868
  %v1331 = vpack.c.b16 %v875, %v869
  %v1332 = vpack.c.b16 %v882, %v876
  %v1333 = vpack.c.b16 %v883, %v877
  %v1334 = vpack.c.b16 %v884, %v878
  %v1335 = vpack.c.b16 %v885, %v879
  %v1336 = vpack.c.b16 %v886, %v880
  %v1337 = vpack.c.b16 %v887, %v881
  %v1338 = vpack.c.b16 %v894, %v888
  %v1339 = vpack.c.b16 %v895, %v889
  %v1340 = vpack.c.b16 %v896, %v890
  %v1341 = vpack.c.b16 %v897, %v891
  %v1342 = vpack.c.b16 %v898, %v892
  %v1343 = vpack.c.b16 %v899, %v893
  %v1344 = vpack.c.b16 %v906, %v900
  %v1345 = vpack.c.b16 %v907, %v901
  %v1346 = vpack.c.b16 %v908, %v902
  %v1347 = vpack.c.b16 %v909, %v903
  %v1348 = vpack.c.b16 %v910, %v904
  %v1349 = vpack.c.b16 %v911, %v905
  %v1350 = vpack.c.b16 %v918, %v912
  %v1351 = vpack.c.b16 %v919, %v913
  %v1352 = vpack.c.b16 %v920, %v914
  %v1353 = vpack.c.b16 %v921, %v915
  %v1354 = vpack.c.b16 %v922, %v916
  %v1355 = vpack.c.b16 %v923, %v917
  %v1356 = vpack.c.b16 %v930, %v924
  %v1357 = vpack.c.b16 %v931, %v925
  %v1358 = vpack.c.b16 %v932, %v926
  %v1359 = vpack.c.b16 %v933, %v927
  %v1360 = vpack.c.b16 %v934, %v928
  %v1361 = vpack.c.b16 %v935, %v929
  %v1362 = vpack.c.b16 %v942, %v936
  %v1363 = vpack.c.b16 %v943, %v937
  %v1364 = vpack.c.b16 %v944, %v938
  %v1365 = vpack.c.b16 %v945, %v939
  %v1366 = vpack.c.b16 %v946, %v940
  %v1367 = vpack.c.b16 %v947, %v941
  %v1368 = vpack.c.b16 %v954, %v948
  %v1369 = vpack.c.b16 %v955, %v949
  %v1370 = vpack.c.b16 %v956, %v950
  %v1371 = vpack.c.b16 %v957, %v951
  %v1372 = vpack.c.b16 %v958, %v952
  %v1373 = vpack.c.b16 %v959, %v953
  %v1374 = vpack.c.b16 %v966, %v960
  %v1375 = vpack.c.b16 %v967, %v961
  %v1376 = vpack.c.b16 %v968, %v962
  %v1377 = vpack.c.b16 %v969, %v963
  %v1378 = vpack.c.b16 %v970, %v964
  %v1379 = vpack.c.b16 %v971, %v965
  %v1380 = vpack.c.b16 %v978, %v972
  %v1381 = vpack.c.b16 %v979, %v973
  %v1382 = vpack.c.b16 %v980, %v974
  %v1383 = vpack.c.b16 %v981, %v975
  %v1384 = vpack.c.b16 %v982, %v976
  %v1385 = vpack.c.b16 %v983, %v977
  %v1386 = vpack.c.b16 %v990, %v984
  %v1387 = vpack.c.b16 %v991, %v985
  %v1388 = vpack.c.b16 %v992, %v986
  %v1389 = vpack.c.b16 %v993, %v987
  %v1390 = vpack.c.b16 %v994, %v988
  %v1391 = vpack.c.b16 %v995, %v989
  %v1392 = vpack.c.b16 %v1002, %v996
  %v1393 = vpack.c.b16 %v1003, %v997
  %v1394 = vpack.c.b16 %v1004, %v998
  %v1395 = vpack.c.b16 %v1005, %v999
  %v1396 = vpack.c.b16 %v1006, %v1000
  %v1397 = vpack.c.b16 %v1007, %v1001
  %v1398 = vpack.c.b16 %v1014, %v1008
  %v1399 = vpack.c.b16 %v1015, %v1009
  %v1400 = vpack.c.b16 %v1016, %v1010
  %v1401 = vpack.c.b16 %v1017, %v1011
  %v1402 = vpack.c.b16 %v1018, %v1012
  %v1403 = vpack.c.b16 %v1019, %v1013
  %v1404 = vpack.c.b16 %v1026, %v1020
  %v1405 = vpack.c.b16 %v1027, %v1021
  %v1406 = vpack.c.b16 %v1028, %v1022
  %v1407 = vpack.c.b16 %v1029, %v1023
  %v1408 = vpack.c.b16 %v1030, %v1024
  %v1409 = vpack.c.b16 %v1031, %v1025
  %v1410 = vpack.c.b16 %v1038, %v1032
  %v1411 = vpack.c.b16 %v1039, %v1033
  %v1412 = vpack.c.b16 %v1040, %v1034
  %v1413 = vpack.c.b16 %v1041, %v1035
  %v1414 = vpack.c.b16 %v1042, %v1036
  %v1415 = vpack.c.b16 %v1043, %v1037
  %v1416 = vpack.c.b16 %v1050, %v1044
  %v1417 = vpack.c.b16 %v1051, %v1045
  %v1418 = vpack.c.b16 %v1052, %v1046
  %v1419 = vpack.c.b16 %v1053, %v1047
  %v1420 = vpack.c.b16 %v1054, %v1048
  %v1421 = vpack.c.b16 %v1055, %v1049
  %v1422 = vpack.c.b16 %v1062, %v1056
  %v1423 = vpack.c.b16 %v1063, %v1057
  %v1424 = vpack.c.b16 %v1064, %v1058
  %v1425 = vpack.c.b16 %v1065, %v1059
  %v1426 = vpack.c.b16 %v1066, %v1060
  %v1427 = vpack.c.b16 %v1067, %v1061
  %v1428 = vpack.c.b16 %v1074, %v1068
  %v1429 = vpack.c.b16 %v1075, %v1069
  %v1430 = vpack.c.b16 %v1076, %v1070
  %v1431 = vpack.c.b16 %v1077, %v1071
  %v1432 = vpack.c.b16 %v1078, %v1072
  %v1433 = vpack.c.b16 %v1079, %v1073
  %v1434 = vpack.c.b16 %v1086, %v1080
  %v1435 = vpack.c.b16 %v1087, %v1081
  %v1436 = vpack.c.b16 %v1088, %v1082
  %v1437 = vpack.c.b16 %v1089, %v1083
  %v1438 = vpack.c.b16 %v1090, %v1084
  %v1439 = vpack.c.b16 %v1091, %v1085
  %v1440 = vpack.c.b16 %v1098, %v1092
  %v1441 = vpack.c.b16 %v1099, %v1093
  %v1442 = vpack.c.b16 %v1100, %v1094
  %v1443 = vpack.c.b16 %v1101, %v1095
  %v1444 = vpack.c.b16 %v1102, %v1096
  %v1445 = vpack.c.b16 %v1103, %v1097
  %v1446 = vpack.c.b16 %v1110, %v1104
  %v1447 = vpack.c.b16 %v1111, %v1105
  %v1448 = vpack.c.b16 %v1112, %v1106
  %v1449 = vpack.c.b16 %v1113, %v1107
  %v1450 = vpack.c.b16 %v1114, %v1108
  %v1451 = vpack.c.b16 %v1115, %v1109
  %v1452 = vpack.c.b16 %v1122, %v1116
  %v1453 = vpack.c.b16 %v1123, %v1117
  %v1454 = vpack.c.b16 %v1124, %v1118
  %v1455 = vpack.c.b16 %v1125, %v1119
  %v1456 = vpack.c.b16 %v1126, %v1120
  %v1457 = vpack.c.b16 %v1127, %v1121
  %v1458 = vpack.c.b16 %v1134, %v1128
  %v1459 = vpack.c.b16 %v1135, %v1129
  %v1460 = vpack.c.b16 %v1136, %v1130
  %v1461 = vpack.c.b16 %v1137, %v1131
  %v1462 = vpack.c.b16 %v1138, %v1132
  %v1463 = vpack.c.b16 %v1139, %v1133
  %v1464 = vpack.c.b16 %v1146, %v1140
  %v1465 = vpack.c.b16 %v1147, %v1141
  %v1466 = vpack.c.b16 %v1148, %v1142
  %v1467 = vpack.c.b16 %v1149, %v1143
  %v1468 = vpack.c.b16 %v1150, %v1144
  %v1469 = vpack.c.b16 %v1151, %v1145
  %v1470 = vpack.c.b16 %v1158, %v1152
  %v1471 = vpack.c.b16 %v1159, %v1153
  %v1472 = vpack.c.b16 %v1160, %v1154
  %v1473 = vpack.c.b16 %v1161, %v1155
  %v1474 = vpack.c.b16 %v1162, %v1156
  %v1475 = vpack.c.b16 %v1163, %v1157
  %v1476 = vpack.c.b16 %v1170, %v1164
  %v1477 = vpack.c.b16 %v1171, %v1165
  %v1478 = vpack.c.b16 %v1172, %v1166
  %v1479 = vpack.c.b16 %v1173, %v1167
  %v1480 = vpack.c.b16 %v1174, %v1168
  %v1481 = vpack.c.b16 %v1175, %v1169
  %v1482 = vpack.c.b16 %v1182, %v1176
  %v1483 = vpack.c.b16 %v1183, %v1177
  %v1484 = vpack.c.b16 %v1184, %v1178
  %v1485 = vpack.c.b16 %v1185, %v1179
  %v1486 = vpack.c.b16 %v1186, %v1180
  %v1487 = vpack.c.b16 %v1187, %v1181
  %v1488 = vpack.c.b16 %v1194, %v1188
  %v1489 = vpack.c.b16 %v1195, %v1189
  %v1490 = vpack.c.b16 %v1196, %v1190
  %v1491 = vpack.c.b16 %v1197, %v1191
  %v1492 = vpack.c.b16 %v1198, %v1192
  %v1493 = vpack.c.b16 %v1199, %v1193
  %v1494 = vpack.c.b16 %v1206, %v1200
  %v1495 = vpack.c.b16 %v1207, %v1201
  %v1496 = vpack.c.b16 %v1208, %v1202
  %v1497 = vpack.c.b16 %v1209, %v1203
  %v1498 = vpack.c.b16 %v1210, %v1204
  %v1499 = vpack.c.b16 %v1211, %v1205
  %1788 = vmatpush.bf16.msra.mxu0 %v1254
  %1789 = vmatpush.bf16.msra.mxu0 %v1248
  %1790 = vmatpush.bf16.msra.mxu0 %v1242
  %1791 = vmatpush.bf16.msra.mxu0 %v1236
  %1792 = vmatpush.bf16.msra.mxu0 %v1230
  %1793 = vmatpush.bf16.msra.mxu0 %v1224
  %1794 = vmatpush.bf16.msra.mxu0 %v1218
  %1795 = vmatpush.bf16.msra.mxu0 %v1212
  %1796 = vmatmul.bf16.gmra.mxu0 %v336
  %v1797 = vpop.f32.mrf.mxu0
  %v1798 = vadd.f32 %v315, %v1797
  %v1799 = vpop.f32.mrf.mxu0
  %1800 = vdwg.mxu0
  %1801 = vmatpush.bf16.msra.mxu0 %v1302
  %1802 = vmatpush.bf16.msra.mxu0 %v1296
  %1803 = vmatpush.bf16.msra.mxu0 %v1290
  %1804 = vmatpush.bf16.msra.mxu0 %v1284
  %1805 = vmatpush.bf16.msra.mxu0 %v1278
  %1806 = vmatpush.bf16.msra.mxu0 %v1272
  %1807 = vmatpush.bf16.msra.mxu0 %v1266
  %1808 = vmatpush.bf16.msra.mxu0 %v1260
  %1809 = vmatmul.bf16.gmra.mxu0 %v337
  %v1810 = vpop.f32.mrf.mxu0
  %v1811 = vadd.f32 %v1798, %v1810
  %v1812 = vpop.f32.mrf.mxu0
  %1813 = vdwg.mxu0
  %1814 = vmatpush.bf16.msra.mxu0 %v1350
  %1815 = vmatpush.bf16.msra.mxu0 %v1344
  %1816 = vmatpush.bf16.msra.mxu0 %v1338
  %1817 = vmatpush.bf16.msra.mxu0 %v1332
  %1818 = vmatpush.bf16.msra.mxu0 %v1326
  %1819 = vmatpush.bf16.msra.mxu0 %v1320
  %1820 = vmatpush.bf16.msra.mxu0 %v1314
  %1821 = vmatpush.bf16.msra.mxu0 %v1308
  %1822 = vmatmul.bf16.gmra.mxu0 %v338
  %v1823 = vpop.f32.mrf.mxu0
  %v1824 = vadd.f32 %v1811, %v1823
  %v1825 = vpop.f32.mrf.mxu0
  %1826 = vdwg.mxu0
  %1827 = vmatpush.bf16.msra.mxu0 %v1398
  %1828 = vmatpush.bf16.msra.mxu0 %v1392
  %1829 = vmatpush.bf16.msra.mxu0 %v1386
  %1830 = vmatpush.bf16.msra.mxu0 %v1380
  %1831 = vmatpush.bf16.msra.mxu0 %v1374
  %1832 = vmatpush.bf16.msra.mxu0 %v1368
  %1833 = vmatpush.bf16.msra.mxu0 %v1362
  %1834 = vmatpush.bf16.msra.mxu0 %v1356
  %1835 = vmatmul.bf16.gmra.mxu0 %v339
  %v1836 = vpop.f32.mrf.mxu0
  %v1837 = vadd.f32 %v1824, %v1836
  %v1838 = vpop.f32.mrf.mxu0
  %1839 = vdwg.mxu0
  %1840 = vmatpush.bf16.msra.mxu0 %v1446
  %1841 = vmatpush.bf16.msra.mxu0 %v1440
  %1842 = vmatpush.bf16.msra.mxu0 %v1434
  %1843 = vmatpush.bf16.msra.mxu0 %v1428
  %1844 = vmatpush.bf16.msra.mxu0 %v1422
  %1845 = vmatpush.bf16.msra.mxu0 %v1416
  %1846 = vmatpush.bf16.msra.mxu0 %v1410
  %1847 = vmatpush.bf16.msra.mxu0 %v1404
  %1848 = vmatmul.bf16.gmra.mxu0 %v340
  %v1849 = vpop.f32.mrf.mxu0
  %v1850 = vadd.f32 %v1837, %v1849
  %v1851 = vpop.f32.mrf.mxu0
  %1852 = vdwg.mxu0
  %1853 = vmatpush.bf16.msra.mxu0 %v1494
  %1854 = vmatpush.bf16.msra.mxu0 %v1488
  %1855 = vmatpush.bf16.msra.mxu0 %v1482
  %1856 = vmatpush.bf16.msra.mxu0 %v1476
  %1857 = vmatpush.bf16.msra.mxu0 %v1470
  %1858 = vmatpush.bf16.msra.mxu0 %v1464
  %1859 = vmatpush.bf16.msra.mxu0 %v1458
  %1860 = vmatpush.bf16.msra.mxu0 %v1452
  %1861 = vmatmul.bf16.gmra.mxu0 %v341
  %v1862 = vpop.f32.mrf.mxu0
  %v1863 = vadd.f32 %v1850, %v1862
  %v1864 = vpop.f32.mrf.mxu0
  %1865 = vdwg.mxu0
  %1866 = vmatpush.bf16.msra.mxu0 %v1255
  %1867 = vmatpush.bf16.msra.mxu0 %v1249
  %1868 = vmatpush.bf16.msra.mxu0 %v1243
  %1869 = vmatpush.bf16.msra.mxu0 %v1237
  %1870 = vmatpush.bf16.msra.mxu0 %v1231
  %1871 = vmatpush.bf16.msra.mxu0 %v1225
  %1872 = vmatpush.bf16.msra.mxu0 %v1219
  %1873 = vmatpush.bf16.msra.mxu0 %v1213
  %1874 = vmatmul.bf16.gmra.mxu0 %v336
  %v1875 = vpop.f32.mrf.mxu0
  %v1876 = vadd.f32 %v316, %v1875
  %v1877 = vpop.f32.mrf.mxu0
  %1878 = vdwg.mxu0
  %1879 = vmatpush.bf16.msra.mxu0 %v1303
  %1880 = vmatpush.bf16.msra.mxu0 %v1297
  %1881 = vmatpush.bf16.msra.mxu0 %v1291
  %1882 = vmatpush.bf16.msra.mxu0 %v1285
  %1883 = vmatpush.bf16.msra.mxu0 %v1279
  %1884 = vmatpush.bf16.msra.mxu0 %v1273
  %1885 = vmatpush.bf16.msra.mxu0 %v1267
  %1886 = vmatpush.bf16.msra.mxu0 %v1261
  %1887 = vmatmul.bf16.gmra.mxu0 %v337
  %v1888 = vpop.f32.mrf.mxu0
  %v1889 = vadd.f32 %v1876, %v1888
  %v1890 = vpop.f32.mrf.mxu0
  %1891 = vdwg.mxu0
  %1892 = vmatpush.bf16.msra.mxu0 %v1351
  %1893 = vmatpush.bf16.msra.mxu0 %v1345
  %1894 = vmatpush.bf16.msra.mxu0 %v1339
  %1895 = vmatpush.bf16.msra.mxu0 %v1333
  %1896 = vmatpush.bf16.msra.mxu0 %v1327
  %1897 = vmatpush.bf16.msra.mxu0 %v1321
  %1898 = vmatpush.bf16.msra.mxu0 %v1315
  %1899 = vmatpush.bf16.msra.mxu0 %v1309
  %1900 = vmatmul.bf16.gmra.mxu0 %v338
  %v1901 = vpop.f32.mrf.mxu0
  %v1902 = vadd.f32 %v1889, %v1901
  %v1903 = vpop.f32.mrf.mxu0
  %1904 = vdwg.mxu0
  %1905 = vmatpush.bf16.msra.mxu0 %v1399
  %1906 = vmatpush.bf16.msra.mxu0 %v1393
  %1907 = vmatpush.bf16.msra.mxu0 %v1387
  %1908 = vmatpush.bf16.msra.mxu0 %v1381
  %1909 = vmatpush.bf16.msra.mxu0 %v1375
  %1910 = vmatpush.bf16.msra.mxu0 %v1369
  %1911 = vmatpush.bf16.msra.mxu0 %v1363
  %1912 = vmatpush.bf16.msra.mxu0 %v1357
  %1913 = vmatmul.bf16.gmra.mxu0 %v339
  %v1914 = vpop.f32.mrf.mxu0
  %v1915 = vadd.f32 %v1902, %v1914
  %v1916 = vpop.f32.mrf.mxu0
  %1917 = vdwg.mxu0
  %1918 = vmatpush.bf16.msra.mxu0 %v1447
  %1919 = vmatpush.bf16.msra.mxu0 %v1441
  %1920 = vmatpush.bf16.msra.mxu0 %v1435
  %1921 = vmatpush.bf16.msra.mxu0 %v1429
  %1922 = vmatpush.bf16.msra.mxu0 %v1423
  %1923 = vmatpush.bf16.msra.mxu0 %v1417
  %1924 = vmatpush.bf16.msra.mxu0 %v1411
  %1925 = vmatpush.bf16.msra.mxu0 %v1405
  %1926 = vmatmul.bf16.gmra.mxu0 %v340
  %v1927 = vpop.f32.mrf.mxu0
  %v1928 = vadd.f32 %v1915, %v1927
  %v1929 = vpop.f32.mrf.mxu0
  %1930 = vdwg.mxu0
  %1931 = vmatpush.bf16.msra.mxu0 %v1495
  %1932 = vmatpush.bf16.msra.mxu0 %v1489
  %1933 = vmatpush.bf16.msra.mxu0 %v1483
  %1934 = vmatpush.bf16.msra.mxu0 %v1477
  %1935 = vmatpush.bf16.msra.mxu0 %v1471
  %1936 = vmatpush.bf16.msra.mxu0 %v1465
  %1937 = vmatpush.bf16.msra.mxu0 %v1459
  %1938 = vmatpush.bf16.msra.mxu0 %v1453
  %1939 = vmatmul.bf16.gmra.mxu0 %v341
  %v1940 = vpop.f32.mrf.mxu0
  %v1941 = vadd.f32 %v1928, %v1940
  %v1942 = vpop.f32.mrf.mxu0
  %1943 = vdwg.mxu0
  %1944 = vmatpush.bf16.msra.mxu0 %v1256
  %1945 = vmatpush.bf16.msra.mxu0 %v1250
  %1946 = vmatpush.bf16.msra.mxu0 %v1244
  %1947 = vmatpush.bf16.msra.mxu0 %v1238
  %1948 = vmatpush.bf16.msra.mxu0 %v1232
  %1949 = vmatpush.bf16.msra.mxu0 %v1226
  %1950 = vmatpush.bf16.msra.mxu0 %v1220
  %1951 = vmatpush.bf16.msra.mxu0 %v1214
  %1952 = vmatmul.bf16.gmra.mxu0 %v336
  %v1953 = vpop.f32.mrf.mxu0
  %v1954 = vadd.f32 %v317, %v1953
  %v1955 = vpop.f32.mrf.mxu0
  %1956 = vdwg.mxu0
  %1957 = vmatpush.bf16.msra.mxu0 %v1304
  %1958 = vmatpush.bf16.msra.mxu0 %v1298
  %1959 = vmatpush.bf16.msra.mxu0 %v1292
  %1960 = vmatpush.bf16.msra.mxu0 %v1286
  %1961 = vmatpush.bf16.msra.mxu0 %v1280
  %1962 = vmatpush.bf16.msra.mxu0 %v1274
  %1963 = vmatpush.bf16.msra.mxu0 %v1268
  %1964 = vmatpush.bf16.msra.mxu0 %v1262
  %1965 = vmatmul.bf16.gmra.mxu0 %v337
  %v1966 = vpop.f32.mrf.mxu0
  %v1967 = vadd.f32 %v1954, %v1966
  %v1968 = vpop.f32.mrf.mxu0
  %1969 = vdwg.mxu0
  %1970 = vmatpush.bf16.msra.mxu0 %v1352
  %1971 = vmatpush.bf16.msra.mxu0 %v1346
  %1972 = vmatpush.bf16.msra.mxu0 %v1340
  %1973 = vmatpush.bf16.msra.mxu0 %v1334
  %1974 = vmatpush.bf16.msra.mxu0 %v1328
  %1975 = vmatpush.bf16.msra.mxu0 %v1322
  %1976 = vmatpush.bf16.msra.mxu0 %v1316
  %1977 = vmatpush.bf16.msra.mxu0 %v1310
  %1978 = vmatmul.bf16.gmra.mxu0 %v338
  %v1979 = vpop.f32.mrf.mxu0
  %v1980 = vadd.f32 %v1967, %v1979
  %v1981 = vpop.f32.mrf.mxu0
  %1982 = vdwg.mxu0
  %1983 = vmatpush.bf16.msra.mxu0 %v1400
  %1984 = vmatpush.bf16.msra.mxu0 %v1394
  %1985 = vmatpush.bf16.msra.mxu0 %v1388
  %1986 = vmatpush.bf16.msra.mxu0 %v1382
  %1987 = vmatpush.bf16.msra.mxu0 %v1376
  %1988 = vmatpush.bf16.msra.mxu0 %v1370
  %1989 = vmatpush.bf16.msra.mxu0 %v1364
  %1990 = vmatpush.bf16.msra.mxu0 %v1358
  %1991 = vmatmul.bf16.gmra.mxu0 %v339
  %v1992 = vpop.f32.mrf.mxu0
  %v1993 = vadd.f32 %v1980, %v1992
  %v1994 = vpop.f32.mrf.mxu0
  %1995 = vdwg.mxu0
  %1996 = vmatpush.bf16.msra.mxu0 %v1448
  %1997 = vmatpush.bf16.msra.mxu0 %v1442
  %1998 = vmatpush.bf16.msra.mxu0 %v1436
  %1999 = vmatpush.bf16.msra.mxu0 %v1430
  %2000 = vmatpush.bf16.msra.mxu0 %v1424
  %2001 = vmatpush.bf16.msra.mxu0 %v1418
  %2002 = vmatpush.bf16.msra.mxu0 %v1412
  %2003 = vmatpush.bf16.msra.mxu0 %v1406
  %2004 = vmatmul.bf16.gmra.mxu0 %v340
  %v2005 = vpop.f32.mrf.mxu0
  %v2006 = vadd.f32 %v1993, %v2005
  %v2007 = vpop.f32.mrf.mxu0
  %2008 = vdwg.mxu0
  %2009 = vmatpush.bf16.msra.mxu0 %v1496
  %2010 = vmatpush.bf16.msra.mxu0 %v1490
  %2011 = vmatpush.bf16.msra.mxu0 %v1484
  %2012 = vmatpush.bf16.msra.mxu0 %v1478
  %2013 = vmatpush.bf16.msra.mxu0 %v1472
  %2014 = vmatpush.bf16.msra.mxu0 %v1466
  %2015 = vmatpush.bf16.msra.mxu0 %v1460
  %2016 = vmatpush.bf16.msra.mxu0 %v1454
  %2017 = vmatmul.bf16.gmra.mxu0 %v341
  %v2018 = vpop.f32.mrf.mxu0
  %v2019 = vadd.f32 %v2006, %v2018
  %v2020 = vpop.f32.mrf.mxu0
  %2021 = vdwg.mxu0
  %2022 = vmatpush.bf16.msra.mxu0 %v1257
  %2023 = vmatpush.bf16.msra.mxu0 %v1251
  %2024 = vmatpush.bf16.msra.mxu0 %v1245
  %2025 = vmatpush.bf16.msra.mxu0 %v1239
  %2026 = vmatpush.bf16.msra.mxu0 %v1233
  %2027 = vmatpush.bf16.msra.mxu0 %v1227
  %2028 = vmatpush.bf16.msra.mxu0 %v1221
  %2029 = vmatpush.bf16.msra.mxu0 %v1215
  %2030 = vmatmul.bf16.gmra.mxu0 %v336
  %v2031 = vpop.f32.mrf.mxu0
  %v2032 = vadd.f32 %v318, %v2031
  %v2033 = vpop.f32.mrf.mxu0
  %2034 = vdwg.mxu0
  %2035 = vmatpush.bf16.msra.mxu0 %v1305
  %2036 = vmatpush.bf16.msra.mxu0 %v1299
  %2037 = vmatpush.bf16.msra.mxu0 %v1293
  %2038 = vmatpush.bf16.msra.mxu0 %v1287
  %2039 = vmatpush.bf16.msra.mxu0 %v1281
  %2040 = vmatpush.bf16.msra.mxu0 %v1275
  %2041 = vmatpush.bf16.msra.mxu0 %v1269
  %2042 = vmatpush.bf16.msra.mxu0 %v1263
  %2043 = vmatmul.bf16.gmra.mxu0 %v337
  %v2044 = vpop.f32.mrf.mxu0
  %v2045 = vadd.f32 %v2032, %v2044
  %v2046 = vpop.f32.mrf.mxu0
  %2047 = vdwg.mxu0
  %2048 = vmatpush.bf16.msra.mxu0 %v1353
  %2049 = vmatpush.bf16.msra.mxu0 %v1347
  %2050 = vmatpush.bf16.msra.mxu0 %v1341
  %2051 = vmatpush.bf16.msra.mxu0 %v1335
  %2052 = vmatpush.bf16.msra.mxu0 %v1329
  %2053 = vmatpush.bf16.msra.mxu0 %v1323
  %2054 = vmatpush.bf16.msra.mxu0 %v1317
  %2055 = vmatpush.bf16.msra.mxu0 %v1311
  %2056 = vmatmul.bf16.gmra.mxu0 %v338
  %v2057 = vpop.f32.mrf.mxu0
  %v2058 = vadd.f32 %v2045, %v2057
  %v2059 = vpop.f32.mrf.mxu0
  %2060 = vdwg.mxu0
  %2061 = vmatpush.bf16.msra.mxu0 %v1401
  %2062 = vmatpush.bf16.msra.mxu0 %v1395
  %2063 = vmatpush.bf16.msra.mxu0 %v1389
  %2064 = vmatpush.bf16.msra.mxu0 %v1383
  %2065 = vmatpush.bf16.msra.mxu0 %v1377
  %2066 = vmatpush.bf16.msra.mxu0 %v1371
  %2067 = vmatpush.bf16.msra.mxu0 %v1365
  %2068 = vmatpush.bf16.msra.mxu0 %v1359
  %2069 = vmatmul.bf16.gmra.mxu0 %v339
  %v2070 = vpop.f32.mrf.mxu0
  %v2071 = vadd.f32 %v2058, %v2070
  %v2072 = vpop.f32.mrf.mxu0
  %2073 = vdwg.mxu0
  %2074 = vmatpush.bf16.msra.mxu0 %v1449
  %2075 = vmatpush.bf16.msra.mxu0 %v1443
  %2076 = vmatpush.bf16.msra.mxu0 %v1437
  %2077 = vmatpush.bf16.msra.mxu0 %v1431
  %2078 = vmatpush.bf16.msra.mxu0 %v1425
  %2079 = vmatpush.bf16.msra.mxu0 %v1419
  %2080 = vmatpush.bf16.msra.mxu0 %v1413
  %2081 = vmatpush.bf16.msra.mxu0 %v1407
  %2082 = vmatmul.bf16.gmra.mxu0 %v340
  %v2083 = vpop.f32.mrf.mxu0
  %v2084 = vadd.f32 %v2071, %v2083
  %v2085 = vpop.f32.mrf.mxu0
  %2086 = vdwg.mxu0
  %2087 = vmatpush.bf16.msra.mxu0 %v1497
  %2088 = vmatpush.bf16.msra.mxu0 %v1491
  %2089 = vmatpush.bf16.msra.mxu0 %v1485
  %2090 = vmatpush.bf16.msra.mxu0 %v1479
  %2091 = vmatpush.bf16.msra.mxu0 %v1473
  %2092 = vmatpush.bf16.msra.mxu0 %v1467
  %2093 = vmatpush.bf16.msra.mxu0 %v1461
  %2094 = vmatpush.bf16.msra.mxu0 %v1455
  %2095 = vmatmul.bf16.gmra.mxu0 %v341
  %v2096 = vpop.f32.mrf.mxu0
  %v2097 = vadd.f32 %v2084, %v2096
  %v2098 = vpop.f32.mrf.mxu0
  %2099 = vdwg.mxu0
  %2100 = vmatpush.bf16.msra.mxu0 %v1258
  %2101 = vmatpush.bf16.msra.mxu0 %v1252
  %2102 = vmatpush.bf16.msra.mxu0 %v1246
  %2103 = vmatpush.bf16.msra.mxu0 %v1240
  %2104 = vmatpush.bf16.msra.mxu0 %v1234
  %2105 = vmatpush.bf16.msra.mxu0 %v1228
  %2106 = vmatpush.bf16.msra.mxu0 %v1222
  %2107 = vmatpush.bf16.msra.mxu0 %v1216
  %2108 = vmatmul.bf16.gmra.mxu0 %v336
  %v2109 = vpop.f32.mrf.mxu0
  %v2110 = vadd.f32 %v319, %v2109
  %v2111 = vpop.f32.mrf.mxu0
  %2112 = vdwg.mxu0
  %2113 = vmatpush.bf16.msra.mxu0 %v1306
  %2114 = vmatpush.bf16.msra.mxu0 %v1300
  %2115 = vmatpush.bf16.msra.mxu0 %v1294
  %2116 = vmatpush.bf16.msra.mxu0 %v1288
  %2117 = vmatpush.bf16.msra.mxu0 %v1282
  %2118 = vmatpush.bf16.msra.mxu0 %v1276
  %2119 = vmatpush.bf16.msra.mxu0 %v1270
  %2120 = vmatpush.bf16.msra.mxu0 %v1264
  %2121 = vmatmul.bf16.gmra.mxu0 %v337
  %v2122 = vpop.f32.mrf.mxu0
  %v2123 = vadd.f32 %v2110, %v2122
  %v2124 = vpop.f32.mrf.mxu0
  %2125 = vdwg.mxu0
  %2126 = vmatpush.bf16.msra.mxu0 %v1354
  %2127 = vmatpush.bf16.msra.mxu0 %v1348
  %2128 = vmatpush.bf16.msra.mxu0 %v1342
  %2129 = vmatpush.bf16.msra.mxu0 %v1336
  %2130 = vmatpush.bf16.msra.mxu0 %v1330
  %2131 = vmatpush.bf16.msra.mxu0 %v1324
  %2132 = vmatpush.bf16.msra.mxu0 %v1318
  %2133 = vmatpush.bf16.msra.mxu0 %v1312
  %2134 = vmatmul.bf16.gmra.mxu0 %v338
  %v2135 = vpop.f32.mrf.mxu0
  %v2136 = vadd.f32 %v2123, %v2135
  %v2137 = vpop.f32.mrf.mxu0
  %2138 = vdwg.mxu0
  %2139 = vmatpush.bf16.msra.mxu0 %v1402
  %2140 = vmatpush.bf16.msra.mxu0 %v1396
  %2141 = vmatpush.bf16.msra.mxu0 %v1390
  %2142 = vmatpush.bf16.msra.mxu0 %v1384
  %2143 = vmatpush.bf16.msra.mxu0 %v1378
  %2144 = vmatpush.bf16.msra.mxu0 %v1372
  %2145 = vmatpush.bf16.msra.mxu0 %v1366
  %2146 = vmatpush.bf16.msra.mxu0 %v1360
  %2147 = vmatmul.bf16.gmra.mxu0 %v339
  %v2148 = vpop.f32.mrf.mxu0
  %v2149 = vadd.f32 %v2136, %v2148
  %v2150 = vpop.f32.mrf.mxu0
  %2151 = vdwg.mxu0
  %2152 = vmatpush.bf16.msra.mxu0 %v1450
  %2153 = vmatpush.bf16.msra.mxu0 %v1444
  %2154 = vmatpush.bf16.msra.mxu0 %v1438
  %2155 = vmatpush.bf16.msra.mxu0 %v1432
  %2156 = vmatpush.bf16.msra.mxu0 %v1426
  %2157 = vmatpush.bf16.msra.mxu0 %v1420
  %2158 = vmatpush.bf16.msra.mxu0 %v1414
  %2159 = vmatpush.bf16.msra.mxu0 %v1408
  %2160 = vmatmul.bf16.gmra.mxu0 %v340
  %v2161 = vpop.f32.mrf.mxu0
  %v2162 = vadd.f32 %v2149, %v2161
  %v2163 = vpop.f32.mrf.mxu0
  %2164 = vdwg.mxu0
  %2165 = vmatpush.bf16.msra.mxu0 %v1498
  %2166 = vmatpush.bf16.msra.mxu0 %v1492
  %2167 = vmatpush.bf16.msra.mxu0 %v1486
  %2168 = vmatpush.bf16.msra.mxu0 %v1480
  %2169 = vmatpush.bf16.msra.mxu0 %v1474
  %2170 = vmatpush.bf16.msra.mxu0 %v1468
  %2171 = vmatpush.bf16.msra.mxu0 %v1462
  %2172 = vmatpush.bf16.msra.mxu0 %v1456
  %2173 = vmatmul.bf16.gmra.mxu0 %v341
  %v2174 = vpop.f32.mrf.mxu0
  %v2175 = vadd.f32 %v2162, %v2174
  %v2176 = vpop.f32.mrf.mxu0
  %2177 = vdwg.mxu0
  %2178 = vmatpush.bf16.msra.mxu0 %v1259
  %2179 = vmatpush.bf16.msra.mxu0 %v1253
  %2180 = vmatpush.bf16.msra.mxu0 %v1247
  %2181 = vmatpush.bf16.msra.mxu0 %v1241
  %2182 = vmatpush.bf16.msra.mxu0 %v1235
  %2183 = vmatpush.bf16.msra.mxu0 %v1229
  %2184 = vmatpush.bf16.msra.mxu0 %v1223
  %2185 = vmatpush.bf16.msra.mxu0 %v1217
  %2186 = vmatmul.bf16.gmra.mxu0 %v336
  %v2187 = vpop.f32.mrf.mxu0
  %v2188 = vadd.f32 %v320, %v2187
  %v2189 = vpop.f32.mrf.mxu0
  %2190 = vdwg.mxu0
  %2191 = vmatpush.bf16.msra.mxu0 %v1307
  %2192 = vmatpush.bf16.msra.mxu0 %v1301
  %2193 = vmatpush.bf16.msra.mxu0 %v1295
  %2194 = vmatpush.bf16.msra.mxu0 %v1289
  %2195 = vmatpush.bf16.msra.mxu0 %v1283
  %2196 = vmatpush.bf16.msra.mxu0 %v1277
  %2197 = vmatpush.bf16.msra.mxu0 %v1271
  %2198 = vmatpush.bf16.msra.mxu0 %v1265
  %2199 = vmatmul.bf16.gmra.mxu0 %v337
  %v2200 = vpop.f32.mrf.mxu0
  %v2201 = vadd.f32 %v2188, %v2200
  %v2202 = vpop.f32.mrf.mxu0
  %2203 = vdwg.mxu0
  %2204 = vmatpush.bf16.msra.mxu0 %v1355
  %2205 = vmatpush.bf16.msra.mxu0 %v1349
  %2206 = vmatpush.bf16.msra.mxu0 %v1343
  %2207 = vmatpush.bf16.msra.mxu0 %v1337
  %2208 = vmatpush.bf16.msra.mxu0 %v1331
  %2209 = vmatpush.bf16.msra.mxu0 %v1325
  %2210 = vmatpush.bf16.msra.mxu0 %v1319
  %2211 = vmatpush.bf16.msra.mxu0 %v1313
  %2212 = vmatmul.bf16.gmra.mxu0 %v338
  %v2213 = vpop.f32.mrf.mxu0
  %v2214 = vadd.f32 %v2201, %v2213
  %v2215 = vpop.f32.mrf.mxu0
  %2216 = vdwg.mxu0
  %2217 = vmatpush.bf16.msra.mxu0 %v1403
  %2218 = vmatpush.bf16.msra.mxu0 %v1397
  %2219 = vmatpush.bf16.msra.mxu0 %v1391
  %2220 = vmatpush.bf16.msra.mxu0 %v1385
  %2221 = vmatpush.bf16.msra.mxu0 %v1379
  %2222 = vmatpush.bf16.msra.mxu0 %v1373
  %2223 = vmatpush.bf16.msra.mxu0 %v1367
  %2224 = vmatpush.bf16.msra.mxu0 %v1361
  %2225 = vmatmul.bf16.gmra.mxu0 %v339
  %v2226 = vpop.f32.mrf.mxu0
  %v2227 = vadd.f32 %v2214, %v2226
  %v2228 = vpop.f32.mrf.mxu0
  %2229 = vdwg.mxu0
  %2230 = vmatpush.bf16.msra.mxu0 %v1451
  %2231 = vmatpush.bf16.msra.mxu0 %v1445
  %2232 = vmatpush.bf16.msra.mxu0 %v1439
  %2233 = vmatpush.bf16.msra.mxu0 %v1433
  %2234 = vmatpush.bf16.msra.mxu0 %v1427
  %2235 = vmatpush.bf16.msra.mxu0 %v1421
  %2236 = vmatpush.bf16.msra.mxu0 %v1415
  %2237 = vmatpush.bf16.msra.mxu0 %v1409
  %2238 = vmatmul.bf16.gmra.mxu0 %v340
  %v2239 = vpop.f32.mrf.mxu0
  %v2240 = vadd.f32 %v2227, %v2239
  %v2241 = vpop.f32.mrf.mxu0
  %2242 = vdwg.mxu0
  %2243 = vmatpush.bf16.msra.mxu0 %v1499
  %2244 = vmatpush.bf16.msra.mxu0 %v1493
  %2245 = vmatpush.bf16.msra.mxu0 %v1487
  %2246 = vmatpush.bf16.msra.mxu0 %v1481
  %2247 = vmatpush.bf16.msra.mxu0 %v1475
  %2248 = vmatpush.bf16.msra.mxu0 %v1469
  %2249 = vmatpush.bf16.msra.mxu0 %v1463
  %2250 = vmatpush.bf16.msra.mxu0 %v1457
  %2251 = vmatmul.bf16.gmra.mxu0 %v341
  %v2252 = vpop.f32.mrf.mxu0
  %v2253 = vadd.f32 %v2240, %v2252
  %v2254 = vpop.f32.mrf.mxu0
  %2255 = vdwg.mxu0
  %v2256 = vtanh.pop %v1863
  %v2257 = vtanh.pop %v1941
  %v2258 = vtanh.pop %v2019
  %v2259 = vtanh.pop %v2097
  %v2260 = vtanh.pop %v2175
  %v2261 = vtanh.pop %v2253
  %v2262 = vld [vmem:[%s3] sm:$0x3f]
  %v2264 = vperm.slane %v2262, 0
  %v2265 = vperm.slane %v2262, 1
  %v2266 = vperm.slane %v2262, 2
  %v2267 = vperm.slane %v2262, 3
  %v2268 = vperm.slane %v2262, 4
  %v2269 = vperm.slane %v2262, 5
  %v2276 = vmul.f32 %v2256, %v2264
  %v2277 = vmul.f32 %v2257, %v2265
  %v2278 = vmul.f32 %v2258, %v2266
  %v2279 = vmul.f32 %v2259, %v2267
  %v2280 = vmul.f32 %v2260, %v2268
  %v2281 = vmul.f32 %v2261, %v2269
  %v2282 = vadd.f32 %v2276, %v2277
  %v2283 = vadd.f32 %v2282, %v2278
  %v2284 = vadd.f32 %v2283, %v2279
  %v2285 = vadd.f32 %v2284, %v2280
  %v2286 = vadd.f32 %v2285, %v2281
  %2287 = vadd.xlane.f32.xlu0 %v2286
  %v2288 = vpop.xlane.xlu0 %2287
  %v2289 = vld [vmem:[#allocation2] sm:$0x1]
  %v2291 = vperm.slane %v2289, 0
  %v2293 = vadd.f32 %v2288, %v2291
  %v2294 = vxor.u32 %v2293, 2147483648
  %v2295 = vmul.f32 %v2294, 1.442695
  %v2296 = vpow.pop %v2295
  %v2297 = vadd.f32 %v2296, 1.0
  %v2298 = vrcp.pop %v2297
  %v2299 = vmul.f32 %v2297, %v2298
  %v2300 = vsub.f32 1.0, %v2299
  %v2301 = vmul.f32 %v2298, %v2300
  %v2302 = vadd.f32 %v2298, %v2301
  %vm2303 = vweird.f32 %v2297
  %vm2304 = vweird.f32 %v2298
  %vm2305 = vmor %vm2303, %vm2304
  %v2306 = vsel %vm2305, %v2298, %v2302
  %v2307 = vand.u32 2147483647, %v2297
  %vm2308 = vcmp.eq.f32.partialorder %v2307, 8.507059e+37
  %v2309 = vand.u32 %v2297, 2147483648
  %v2310 = vor.u32 1.1754944e-38, %v2309
  %v2311 = vsel %vm2308, %v2310, %v2306
  %v2312 = vmul.f32 1.0, %v2311
  %vm2313 = vcmask 7168
  %2314 = vst.msk [vmem:[%s5] sm:$0xff] %vm2313, %v2312
  // Predicated region
  $region22: #{transformer_forward.1} parent=0 // pred_check
    _
  $region23: #{transformer_forward.1} parent=0 // pred_check_branch
    %2316 = sbr.rel (0) target = $region25
  $region24: #{transformer_forward.1} parent=0 // pred_region
    _
  $region25: #{transformer_forward.1} parent=0 // pred_fallthru
    _
  // Predicated region
  $region26: #{transformer_forward.1} parent=0 // pred_check
    _
  $region27: #{transformer_forward.1} parent=0 // pred_check_branch
    %2318 = sbr.rel (0) target = $region29
  $region28: #{transformer_forward.1} parent=0 // pred_region
    _
  $region29: #{transformer_forward.1} parent=0 // pred_fallthru
    _

</llo_original>
